<compile_context>
chip_gen: v7x
topology: tpu7x:2x2x1
jax: 0.10.0
libtpu: 0.0.40
codegen_flags: <defaults>
</compile_context>

<pallas_src>
import jax
import jax.numpy as jnp
from jax.experimental import pallas as pl
from jax.experimental.pallas import tpu as pltpu

# ---- module-consistent hyperparameters --------------------------------------
B = 2              # batch
HB = 32            # bert.config.hidden_size
HIDDEN = 32        # ParticipantsModel hidden_size (LSTM hidden)
C_SENT = 64        # conv1d_sent out_channels (hard-coded 64 in the module)
K = 3              # conv kernel_size
L_SENT = 16        # sentence length (tokens)
L_SPAN = HIDDEN    # span length; must equal hidden_size for torch.cat(dim=1)
VOCAB = 50

L_SENT_C = L_SENT - K + 1      # 14 (conv1d_sent output length == LSTM steps)
L_COMB = HB + L_SENT_C         # 46 (torch cat axis == softmax / max axis)
G4 = 4 * HIDDEN                # 128 (i|f|g|o gate lanes; packed-weight lane width)

# packed weight buffer row offsets (every row is G4 = 128 lanes wide, f32)
_W_FUSED = 0                    # K*HB rows : W_fused[k] = w_sent[k] @ w_ih
_W_HH    = _W_FUSED + K * HB    # 96  : HIDDEN rows
_W_FC    = _W_HH + HIDDEN       # 128 : HIDDEN rows (fc weight, lanes >= 2 are zero)
_B_FUSED = _W_FC + HIDDEN       # 160 : 1 row (b_sent @ w_ih + b_ih + b_hh)
_B_FC    = _B_FUSED + 1         # 161 : 1 row (fc bias, lanes >= 2 are zero)
W_ROWS   = _B_FC + 1            # 162

# packed embedding buffer row offsets (HB == L_SPAN == 32 lanes wide, f32)
_SPAN_OFF = L_SENT * B          # 32 : sentence rows are [0, 32), row index = t*B + b
E_ROWS    = _SPAN_OFF + B * HB  # 96 : span^T rows for batch b: [32 + b*HB, 32 + (b+1)*HB)


# ---- the Pallas kernel -------------------------------------------------------
def participants_kernel(emb_ref, w_ref, out_ref, lstm_ref):
    # emb_ref : (E_ROWS, 32)  packed embeddings (sentence time-major + span transposed)
    # w_ref   : (W_ROWS, G4)  packed weights
    # out_ref : (B, 1)        final logits
    # lstm_ref: (B*L_SENT_C, HIDDEN) scratch, row b*L_SENT_C + t = h_t of batch b

    w_hh    = w_ref[_W_HH:_W_HH + HIDDEN, :]        # (H, 4H)
    w_fc    = w_ref[_W_FC:_W_FC + HIDDEN, :]        # (H, 4H), lanes >= 2 zero
    b_fused = w_ref[_B_FUSED:_B_FUSED + 1, :]       # (1, 4H)
    b_fc    = w_ref[_B_FC:_B_FC + 1, :]             # (1, 4H), lanes >= 2 zero

    # Fused conv1d_sent + LSTM input projection, both batch elements stacked:
    #   gates[t*B + b, :] = sum_k sent[b, t+k, :] @ (w_sent[k] @ w_ih) + b_fused
    gates = b_fused                                  # broadcasts to (B*L_SENT_C, 4H)
    for k in range(K):
        x_k = emb_ref[k * B:k * B + B * L_SENT_C, :]                   # (28, HB)
        w_k = w_ref[_W_FUSED + k * HB:_W_FUSED + (k + 1) * HB, :]      # (HB, 4H)
        gates = gates + jnp.dot(x_k, w_k, preferred_element_type=jnp.float32)

    # One 14-step recurrence for both batch rows; PyTorch gate order (i, f, g, o).
    h = jnp.zeros((B, HIDDEN), jnp.float32)
    c = jnp.zeros((B, HIDDEN), jnp.float32)
    for t in range(L_SENT_C):                        # short fixed trip count -> unrolled
        g = gates[t * B:(t + 1) * B, :] + jnp.dot(h, w_hh,
                                                  preferred_element_type=jnp.float32)
        s = jax.nn.sigmoid(g)                        # one EUP pass covers i, f, o
        i_g = s[:, 0 * HIDDEN:1 * HIDDEN]
        f_g = s[:, 1 * HIDDEN:2 * HIDDEN]
        o_g = s[:, 3 * HIDDEN:4 * HIDDEN]
        g_g = jnp.tanh(g[:, 2 * HIDDEN:3 * HIDDEN])
        c = f_g * c + i_g * g_g
        h = o_g * jnp.tanh(c)
        for b in range(B):                           # cheap row stores into scratch
            lstm_ref[b * L_SENT_C + t:b * L_SENT_C + t + 1, :] = h[b:b + 1, :]

    # fc + softmax(dim=1) + max + max, without materializing the 46-row concat:
    # per class c, max over rows of softmax = 1/Z_c, so output = 1 / min_c Z_c.
    for b in range(B):
        span_tb = emb_ref[_SPAN_OFF + b * HB:_SPAN_OFF + (b + 1) * HB, :]   # (HB, HIDDEN)
        lg_span = jnp.dot(span_tb, w_fc, preferred_element_type=jnp.float32) + b_fc
        lstm_b = lstm_ref[b * L_SENT_C:(b + 1) * L_SENT_C, :]               # (14, HIDDEN)
        lg_lstm = jnp.dot(lstm_b, w_fc, preferred_element_type=jnp.float32) + b_fc

        m = jnp.maximum(jnp.max(lg_span, axis=0, keepdims=True),
                        jnp.max(lg_lstm, axis=0, keepdims=True))            # (1, 4H)
        z = (jnp.sum(jnp.exp(lg_span - m), axis=0, keepdims=True)
             + jnp.sum(jnp.exp(lg_lstm - m), axis=0, keepdims=True))        # (1, 4H)
        # Padded classes (zero weight & bias) have logits == 0 -> z == L_COMB, while
        # every real z <= L_COMB (each exp term <= 1), so the min over all 128 lanes
        # equals the min over the 2 real classes.
        z_min = jnp.min(z, axis=1, keepdims=True)                           # (1, 1)
        out_ref[b:b + 1, :] = pl.reciprocal(z_min, approx=True)


# ---- wrapper / glue ----------------------------------------------------------
def pack_weights(params):
    """Fuse conv1d_sent into the LSTM input projection and pack all weights into one
    (W_ROWS, 128) f32 buffer (one DMA instead of nine)."""
    w_fused = jnp.einsum("kcd,dg->kcg", params["w_sent"], params["w_ih"])   # (K, HB, 4H)
    b_fused = params["b_sent"] @ params["w_ih"] + params["b_lstm"]          # (1, 4H)
    w_fc_pad = jnp.zeros((HIDDEN, G4), jnp.float32).at[:, :2].set(params["w_fc"])
    b_fc_pad = jnp.zeros((1, G4), jnp.float32).at[:, :2].set(params["b_fc"])
    return jnp.concatenate(
        [w_fused.reshape(K * HB, G4), params["w_hh"], w_fc_pad, b_fused, b_fc_pad],
        axis=0)                                                             # (162, 128)


def pack_embeddings(sent_emb, span_emb):
    """Layout plumbing: sentence embeddings time-major interleaved (row t*B + b),
    span embeddings pre-transposed per batch (row b*HB + h, col = span position)."""
    sent_tm = jnp.transpose(sent_emb, (1, 0, 2)).reshape(L_SENT * B, HB)
    span_t = jnp.transpose(span_emb, (0, 2, 1)).reshape(B * HB, L_SPAN)
    return jnp.concatenate([sent_tm, span_t], axis=0)                       # (96, 32)


def participants_forward(sent_ids, span_ids, params):
    # "bert" stand-in: deterministic embedding lookup -> (B, L, HB)
    sent_emb = params["emb"][sent_ids].astype(jnp.float32)
    span_emb = params["emb"][span_ids].astype(jnp.float32)

    vmem = pl.BlockSpec(memory_space=pltpu.MemorySpace.VMEM)
    out = pl.pallas_call(
        participants_kernel,
        out_shape=jax.ShapeDtypeStruct((B, 1), jnp.float32),
        in_specs=[vmem, vmem],
        out_specs=vmem,
        scratch_shapes=[pltpu.VMEM((B * L_SENT_C, HIDDEN), jnp.float32)],
    )(pack_embeddings(sent_emb, span_emb), pack_weights(params))
    return out[:, 0]                                                        # (B,)


# ---- pure-JAX reference (unfused, full softmax path) -------------------------
def reference_forward(sent_ids, span_ids, params):
    sent_emb = params["emb"][sent_ids].astype(jnp.float32)
    span_emb = params["emb"][span_ids].astype(jnp.float32)

    def conv1d(x, w_t, bias):
        L_out = x.shape[1] - K + 1
        acc = jnp.zeros((x.shape[0], L_out, w_t.shape[-1]), jnp.float32)
        for k in range(K):
            acc = acc + jnp.einsum("blc,cd->bld", x[:, k:k + L_out, :], w_t[k])
        return acc + bias

    sent_feat = conv1d(sent_emb, params["w_sent"], params["b_sent"])
    gates_x = jnp.einsum("blc,cd->bld", sent_feat, params["w_ih"]) + params["b_lstm"]
    h = jnp.zeros((B, HIDDEN), jnp.float32)
    c = jnp.zeros((B, HIDDEN), jnp.float32)
    hs = []
    for t in range(L_SENT_C):
        g = gates_x[:, t, :] + h @ params["w_hh"]
        i_g = jax.nn.sigmoid(g[:, :HIDDEN])
        f_g = jax.nn.sigmoid(g[:, HIDDEN:2 * HIDDEN])
        g_g = jnp.tanh(g[:, 2 * HIDDEN:3 * HIDDEN])
        o_g = jax.nn.sigmoid(g[:, 3 * HIDDEN:])
        c = f_g * c + i_g * g_g
        h = o_g * jnp.tanh(c)
        hs.append(h)
    lstm_out = jnp.stack(hs, axis=1)                                        # (B, 14, H)
    combined = jnp.concatenate([jnp.transpose(span_emb, (0, 2, 1)), lstm_out], axis=1)
    logits = combined @ params["w_fc"] + params["b_fc"]                     # (B, 46, 2)
    probs = jax.nn.softmax(logits, axis=1)
    return jnp.max(jnp.max(probs, axis=1), axis=1)                          # (B,)


# ---- deterministic parameter init (PyTorch shapes, pre-transposed) -----------
def init_params(key):
    ks = jax.random.split(key, 10)
    s = 0.1
    return {
        "emb":    s * jax.random.normal(ks[0], (VOCAB, HB), jnp.float32),
        # conv1d_span exists in the module but its output never reaches the returned
        # logits (dead in the torch forward); kept here for fidelity, unused below.
        "w_span": s * jax.random.normal(ks[1], (K, HB, HIDDEN), jnp.float32),
        "b_span": s * jax.random.normal(ks[2], (1, HIDDEN), jnp.float32),
        # conv1d_sent weight (64, HB, K) stored as (K, HB, 64)
        "w_sent": s * jax.random.normal(ks[3], (K, HB, C_SENT), jnp.float32),
        "b_sent": s * jax.random.normal(ks[4], (1, C_SENT), jnp.float32),
        # LSTM weight_ih_l0 (4H, 64) stored transposed; biases b_ih + b_hh combined
        "w_ih":   s * jax.random.normal(ks[5], (C_SENT, G4), jnp.float32),
        "w_hh":   s * jax.random.normal(ks[6], (HIDDEN, G4), jnp.float32),
        "b_lstm": s * jax.random.normal(ks[7], (1, G4), jnp.float32),
        # fc weight (2, HIDDEN) stored transposed
        "w_fc":   s * jax.random.normal(ks[8], (HIDDEN, 2), jnp.float32),
        "b_fc":   s * jax.random.normal(ks[9], (1, 2), jnp.float32),
    }


if __name__ == "__main__":
    root = jax.random.PRNGKey(0)
    kp, ksent, kspan = jax.random.split(root, 3)
    params = init_params(kp)
    sent_ids = jax.random.randint(ksent, (B, L_SENT), 0, VOCAB)
    span_ids = jax.random.randint(kspan, (B, L_SPAN), 0, VOCAB)

    out = participants_forward(sent_ids, span_ids, params)
    out = jax.block_until_ready(out)

    ref = reference_forward(sent_ids, span_ids, params)
    assert out.shape == (B,)
    assert jnp.allclose(out, ref, rtol=1e-2, atol=1e-4), (out, ref)
    print("KERNEL_OK")
</pallas_src>

<mosaic_0001>
module attributes {stable_mosaic.version = 11 : i64} {
  func.func @participants_kernel(%arg0: memref<96x32xf32, #tpu.memory_space<vmem>>, %arg1: memref<162x128xf32, #tpu.memory_space<vmem>>, %arg2: memref<2x1xf32, #tpu.memory_space<vmem>>, %arg3: memref<28x32xf32, #tpu.memory_space<vmem>>) attributes {dimension_semantics = [], scalar_prefetch = 0 : i64, scratch_operands = 1 : i64, tpu.core_type = #tpu.core_type<tc>} {
    %c96 = arith.constant 96 : index
    %c0 = arith.constant 0 : index
    %0 = vector.load %arg1[%c96, %c0] : memref<162x128xf32, #tpu.memory_space<vmem>>, vector<32x128xf32>
    %c128 = arith.constant 128 : index
    %c0_0 = arith.constant 0 : index
    %1 = vector.load %arg1[%c128, %c0_0] : memref<162x128xf32, #tpu.memory_space<vmem>>, vector<32x128xf32>
    %c160 = arith.constant 160 : index
    %c0_1 = arith.constant 0 : index
    %2 = vector.load %arg1[%c160, %c0_1] : memref<162x128xf32, #tpu.memory_space<vmem>>, vector<1x128xf32>
    %c161 = arith.constant 161 : index
    %c0_2 = arith.constant 0 : index
    %3 = vector.load %arg1[%c161, %c0_2] : memref<162x128xf32, #tpu.memory_space<vmem>>, vector<1x128xf32>
    %c0_3 = arith.constant 0 : index
    %c0_4 = arith.constant 0 : index
    %4 = vector.load %arg0[%c0_3, %c0_4] : memref<96x32xf32, #tpu.memory_space<vmem>>, vector<28x32xf32>
    %c0_5 = arith.constant 0 : index
    %c0_6 = arith.constant 0 : index
    %5 = vector.load %arg1[%c0_5, %c0_6] : memref<162x128xf32, #tpu.memory_space<vmem>>, vector<32x128xf32>
    %cst = arith.constant dense<0.000000e+00> : vector<28x128xf32>
    %6 = tpu.matmul %4, %5, %cst {dimension_numbers = #tpu.dot_dimension_numbers<[1], [0], [0], [1], [0, 0, 1, 1], [], []>} : vector<28x32xf32>, vector<32x128xf32>, vector<28x128xf32> -> vector<28x128xf32>
    %7 = vector.broadcast %2 : vector<1x128xf32> to vector<28x128xf32>
    %8 = arith.addf %7, %6 : vector<28x128xf32>
    %c2 = arith.constant 2 : index
    %c0_7 = arith.constant 0 : index
    %9 = vector.load %arg0[%c2, %c0_7] : memref<96x32xf32, #tpu.memory_space<vmem>>, vector<28x32xf32>
    %c32 = arith.constant 32 : index
    %c0_8 = arith.constant 0 : index
    %10 = vector.load %arg1[%c32, %c0_8] : memref<162x128xf32, #tpu.memory_space<vmem>>, vector<32x128xf32>
    %cst_9 = arith.constant dense<0.000000e+00> : vector<28x128xf32>
    %11 = tpu.matmul %9, %10, %cst_9 {dimension_numbers = #tpu.dot_dimension_numbers<[1], [0], [0], [1], [0, 0, 1, 1], [], []>} : vector<28x32xf32>, vector<32x128xf32>, vector<28x128xf32> -> vector<28x128xf32>
    %12 = arith.addf %8, %11 : vector<28x128xf32>
    %c4 = arith.constant 4 : index
    %c0_10 = arith.constant 0 : index
    %13 = vector.load %arg0[%c4, %c0_10] : memref<96x32xf32, #tpu.memory_space<vmem>>, vector<28x32xf32>
    %c64 = arith.constant 64 : index
    %c0_11 = arith.constant 0 : index
    %14 = vector.load %arg1[%c64, %c0_11] : memref<162x128xf32, #tpu.memory_space<vmem>>, vector<32x128xf32>
    %cst_12 = arith.constant dense<0.000000e+00> : vector<28x128xf32>
    %15 = tpu.matmul %13, %14, %cst_12 {dimension_numbers = #tpu.dot_dimension_numbers<[1], [0], [0], [1], [0, 0, 1, 1], [], []>} : vector<28x32xf32>, vector<32x128xf32>, vector<28x128xf32> -> vector<28x128xf32>
    %16 = arith.addf %12, %15 : vector<28x128xf32>
    %cst_13 = arith.constant 0.000000e+00 : f32
    %17 = vector.broadcast %cst_13 : f32 to vector<2x32xf32>
    %cst_14 = arith.constant 0.000000e+00 : f32
    %18 = vector.broadcast %cst_14 : f32 to vector<2x32xf32>
    %19 = vector.extract_strided_slice %16 {offsets = [0, 0], sizes = [2, 128], strides = [1, 1]} : vector<28x128xf32> to vector<2x128xf32>
    %cst_15 = arith.constant dense<0.000000e+00> : vector<2x128xf32>
    %20 = tpu.matmul %17, %0, %cst_15 {dimension_numbers = #tpu.dot_dimension_numbers<[1], [0], [0], [1], [0, 0, 1, 1], [], []>} : vector<2x32xf32>, vector<32x128xf32>, vector<2x128xf32> -> vector<2x128xf32>
    %21 = arith.addf %19, %20 : vector<2x128xf32>
    %22 = arith.negf %21 : vector<2x128xf32>
    %23 = math.exp %22 : vector<2x128xf32>
    %cst_16 = arith.constant 1.000000e+00 : f32
    %24 = vector.broadcast %cst_16 : f32 to vector<2x128xf32>
    %25 = arith.addf %24, %23 : vector<2x128xf32>
    %26 = arith.divf %24, %25 : vector<2x128xf32>
    %27 = vector.extract_strided_slice %26 {offsets = [0, 0], sizes = [2, 32], strides = [1, 1]} : vector<2x128xf32> to vector<2x32xf32>
    %28 = vector.extract_strided_slice %26 {offsets = [0, 32], sizes = [2, 32], strides = [1, 1]} : vector<2x128xf32> to vector<2x32xf32>
    %29 = vector.extract_strided_slice %26 {offsets = [0, 96], sizes = [2, 32], strides = [1, 1]} : vector<2x128xf32> to vector<2x32xf32>
    %30 = vector.extract_strided_slice %21 {offsets = [0, 64], sizes = [2, 32], strides = [1, 1]} : vector<2x128xf32> to vector<2x32xf32>
    %31 = math.tanh %30 : vector<2x32xf32>
    %32 = arith.mulf %28, %18 : vector<2x32xf32>
    %33 = arith.mulf %27, %31 : vector<2x32xf32>
    %34 = arith.addf %32, %33 : vector<2x32xf32>
    %35 = math.tanh %34 : vector<2x32xf32>
    %36 = arith.mulf %29, %35 : vector<2x32xf32>
    %37 = vector.extract_strided_slice %36 {offsets = [0, 0], sizes = [1, 32], strides = [1, 1]} : vector<2x32xf32> to vector<1x32xf32>
    %c0_17 = arith.constant 0 : index
    %c0_18 = arith.constant 0 : index
    %38 = vector.load %arg3[%c0_17, %c0_18] : memref<28x32xf32, #tpu.memory_space<vmem>>, vector<1x32xf32>
    tpu.vector_store %arg3[%c0_17, %c0_18], %37 {strides = array<i32>} : memref<28x32xf32, #tpu.memory_space<vmem>>, vector<1x32xf32>,
    %39 = vector.extract_strided_slice %36 {offsets = [1, 0], sizes = [1, 32], strides = [1, 1]} : vector<2x32xf32> to vector<1x32xf32>
    %c14 = arith.constant 14 : index
    %c0_19 = arith.constant 0 : index
    %40 = vector.load %arg3[%c14, %c0_19] : memref<28x32xf32, #tpu.memory_space<vmem>>, vector<1x32xf32>
    tpu.vector_store %arg3[%c14, %c0_19], %39 {strides = array<i32>} : memref<28x32xf32, #tpu.memory_space<vmem>>, vector<1x32xf32>,
    %41 = vector.extract_strided_slice %16 {offsets = [2, 0], sizes = [2, 128], strides = [1, 1]} : vector<28x128xf32> to vector<2x128xf32>
    %cst_20 = arith.constant dense<0.000000e+00> : vector<2x128xf32>
    %42 = tpu.matmul %36, %0, %cst_20 {dimension_numbers = #tpu.dot_dimension_numbers<[1], [0], [0], [1], [0, 0, 1, 1], [], []>} : vector<2x32xf32>, vector<32x128xf32>, vector<2x128xf32> -> vector<2x128xf32>
    %43 = arith.addf %41, %42 : vector<2x128xf32>
    %44 = arith.negf %43 : vector<2x128xf32>
    %45 = math.exp %44 : vector<2x128xf32>
    %cst_21 = arith.constant 1.000000e+00 : f32
    %46 = vector.broadcast %cst_21 : f32 to vector<2x128xf32>
    %47 = arith.addf %46, %45 : vector<2x128xf32>
    %48 = arith.divf %46, %47 : vector<2x128xf32>
    %49 = vector.extract_strided_slice %48 {offsets = [0, 0], sizes = [2, 32], strides = [1, 1]} : vector<2x128xf32> to vector<2x32xf32>
    %50 = vector.extract_strided_slice %48 {offsets = [0, 32], sizes = [2, 32], strides = [1, 1]} : vector<2x128xf32> to vector<2x32xf32>
    %51 = vector.extract_strided_slice %48 {offsets = [0, 96], sizes = [2, 32], strides = [1, 1]} : vector<2x128xf32> to vector<2x32xf32>
    %52 = vector.extract_strided_slice %43 {offsets = [0, 64], sizes = [2, 32], strides = [1, 1]} : vector<2x128xf32> to vector<2x32xf32>
    %53 = math.tanh %52 : vector<2x32xf32>
    %54 = arith.mulf %50, %34 : vector<2x32xf32>
    %55 = arith.mulf %49, %53 : vector<2x32xf32>
    %56 = arith.addf %54, %55 : vector<2x32xf32>
    %57 = math.tanh %56 : vector<2x32xf32>
    %58 = arith.mulf %51, %57 : vector<2x32xf32>
    %59 = vector.extract_strided_slice %58 {offsets = [0, 0], sizes = [1, 32], strides = [1, 1]} : vector<2x32xf32> to vector<1x32xf32>
    %c1 = arith.constant 1 : index
    %c0_22 = arith.constant 0 : index
    %60 = vector.load %arg3[%c1, %c0_22] : memref<28x32xf32, #tpu.memory_space<vmem>>, vector<1x32xf32>
    tpu.vector_store %arg3[%c1, %c0_22], %59 {strides = array<i32>} : memref<28x32xf32, #tpu.memory_space<vmem>>, vector<1x32xf32>,
    %61 = vector.extract_strided_slice %58 {offsets = [1, 0], sizes = [1, 32], strides = [1, 1]} : vector<2x32xf32> to vector<1x32xf32>
    %c15 = arith.constant 15 : index
    %c0_23 = arith.constant 0 : index
    %62 = vector.load %arg3[%c15, %c0_23] : memref<28x32xf32, #tpu.memory_space<vmem>>, vector<1x32xf32>
    tpu.vector_store %arg3[%c15, %c0_23], %61 {strides = array<i32>} : memref<28x32xf32, #tpu.memory_space<vmem>>, vector<1x32xf32>,
    %63 = vector.extract_strided_slice %16 {offsets = [4, 0], sizes = [2, 128], strides = [1, 1]} : vector<28x128xf32> to vector<2x128xf32>
    %cst_24 = arith.constant dense<0.000000e+00> : vector<2x128xf32>
    %64 = tpu.matmul %58, %0, %cst_24 {dimension_numbers = #tpu.dot_dimension_numbers<[1], [0], [0], [1], [0, 0, 1, 1], [], []>} : vector<2x32xf32>, vector<32x128xf32>, vector<2x128xf32> -> vector<2x128xf32>
    %65 = arith.addf %63, %64 : vector<2x128xf32>
    %66 = arith.negf %65 : vector<2x128xf32>
    %67 = math.exp %66 : vector<2x128xf32>
    %cst_25 = arith.constant 1.000000e+00 : f32
    %68 = vector.broadcast %cst_25 : f32 to vector<2x128xf32>
    %69 = arith.addf %68, %67 : vector<2x128xf32>
    %70 = arith.divf %68, %69 : vector<2x128xf32>
    %71 = vector.extract_strided_slice %70 {offsets = [0, 0], sizes = [2, 32], strides = [1, 1]} : vector<2x128xf32> to vector<2x32xf32>
    %72 = vector.extract_strided_slice %70 {offsets = [0, 32], sizes = [2, 32], strides = [1, 1]} : vector<2x128xf32> to vector<2x32xf32>
    %73 = vector.extract_strided_slice %70 {offsets = [0, 96], sizes = [2, 32], strides = [1, 1]} : vector<2x128xf32> to vector<2x32xf32>
    %74 = vector.extract_strided_slice %65 {offsets = [0, 64], sizes = [2, 32], strides = [1, 1]} : vector<2x128xf32> to vector<2x32xf32>
    %75 = math.tanh %74 : vector<2x32xf32>
    %76 = arith.mulf %72, %56 : vector<2x32xf32>
    %77 = arith.mulf %71, %75 : vector<2x32xf32>
    %78 = arith.addf %76, %77 : vector<2x32xf32>
    %79 = math.tanh %78 : vector<2x32xf32>
    %80 = arith.mulf %73, %79 : vector<2x32xf32>
    %81 = vector.extract_strided_slice %80 {offsets = [0, 0], sizes = [1, 32], strides = [1, 1]} : vector<2x32xf32> to vector<1x32xf32>
    %c2_26 = arith.constant 2 : index
    %c0_27 = arith.constant 0 : index
    %82 = vector.load %arg3[%c2_26, %c0_27] : memref<28x32xf32, #tpu.memory_space<vmem>>, vector<1x32xf32>
    tpu.vector_store %arg3[%c2_26, %c0_27], %81 {strides = array<i32>} : memref<28x32xf32, #tpu.memory_space<vmem>>, vector<1x32xf32>,
    %83 = vector.extract_strided_slice %80 {offsets = [1, 0], sizes = [1, 32], strides = [1, 1]} : vector<2x32xf32> to vector<1x32xf32>
    %c16 = arith.constant 16 : index
    %c0_28 = arith.constant 0 : index
    %84 = vector.load %arg3[%c16, %c0_28] : memref<28x32xf32, #tpu.memory_space<vmem>>, vector<1x32xf32>
    tpu.vector_store %arg3[%c16, %c0_28], %83 {strides = array<i32>} : memref<28x32xf32, #tpu.memory_space<vmem>>, vector<1x32xf32>,
    %85 = vector.extract_strided_slice %16 {offsets = [6, 0], sizes = [2, 128], strides = [1, 1]} : vector<28x128xf32> to vector<2x128xf32>
    %cst_29 = arith.constant dense<0.000000e+00> : vector<2x128xf32>
    %86 = tpu.matmul %80, %0, %cst_29 {dimension_numbers = #tpu.dot_dimension_numbers<[1], [0], [0], [1], [0, 0, 1, 1], [], []>} : vector<2x32xf32>, vector<32x128xf32>, vector<2x128xf32> -> vector<2x128xf32>
    %87 = arith.addf %85, %86 : vector<2x128xf32>
    %88 = arith.negf %87 : vector<2x128xf32>
    %89 = math.exp %88 : vector<2x128xf32>
    %cst_30 = arith.constant 1.000000e+00 : f32
    %90 = vector.broadcast %cst_30 : f32 to vector<2x128xf32>
    %91 = arith.addf %90, %89 : vector<2x128xf32>
    %92 = arith.divf %90, %91 : vector<2x128xf32>
    %93 = vector.extract_strided_slice %92 {offsets = [0, 0], sizes = [2, 32], strides = [1, 1]} : vector<2x128xf32> to vector<2x32xf32>
    %94 = vector.extract_strided_slice %92 {offsets = [0, 32], sizes = [2, 32], strides = [1, 1]} : vector<2x128xf32> to vector<2x32xf32>
    %95 = vector.extract_strided_slice %92 {offsets = [0, 96], sizes = [2, 32], strides = [1, 1]} : vector<2x128xf32> to vector<2x32xf32>
    %96 = vector.extract_strided_slice %87 {offsets = [0, 64], sizes = [2, 32], strides = [1, 1]} : vector<2x128xf32> to vector<2x32xf32>
    %97 = math.tanh %96 : vector<2x32xf32>
    %98 = arith.mulf %94, %78 : vector<2x32xf32>
    %99 = arith.mulf %93, %97 : vector<2x32xf32>
    %100 = arith.addf %98, %99 : vector<2x32xf32>
    %101 = math.tanh %100 : vector<2x32xf32>
    %102 = arith.mulf %95, %101 : vector<2x32xf32>
    %103 = vector.extract_strided_slice %102 {offsets = [0, 0], sizes = [1, 32], strides = [1, 1]} : vector<2x32xf32> to vector<1x32xf32>
    %c3 = arith.constant 3 : index
    %c0_31 = arith.constant 0 : index
    %104 = vector.load %arg3[%c3, %c0_31] : memref<28x32xf32, #tpu.memory_space<vmem>>, vector<1x32xf32>
    tpu.vector_store %arg3[%c3, %c0_31], %103 {strides = array<i32>} : memref<28x32xf32, #tpu.memory_space<vmem>>, vector<1x32xf32>,
    %105 = vector.extract_strided_slice %102 {offsets = [1, 0], sizes = [1, 32], strides = [1, 1]} : vector<2x32xf32> to vector<1x32xf32>
    %c17 = arith.constant 17 : index
    %c0_32 = arith.constant 0 : index
    %106 = vector.load %arg3[%c17, %c0_32] : memref<28x32xf32, #tpu.memory_space<vmem>>, vector<1x32xf32>
    tpu.vector_store %arg3[%c17, %c0_32], %105 {strides = array<i32>} : memref<28x32xf32, #tpu.memory_space<vmem>>, vector<1x32xf32>,
    %107 = vector.extract_strided_slice %16 {offsets = [8, 0], sizes = [2, 128], strides = [1, 1]} : vector<28x128xf32> to vector<2x128xf32>
    %cst_33 = arith.constant dense<0.000000e+00> : vector<2x128xf32>
    %108 = tpu.matmul %102, %0, %cst_33 {dimension_numbers = #tpu.dot_dimension_numbers<[1], [0], [0], [1], [0, 0, 1, 1], [], []>} : vector<2x32xf32>, vector<32x128xf32>, vector<2x128xf32> -> vector<2x128xf32>
    %109 = arith.addf %107, %108 : vector<2x128xf32>
    %110 = arith.negf %109 : vector<2x128xf32>
    %111 = math.exp %110 : vector<2x128xf32>
    %cst_34 = arith.constant 1.000000e+00 : f32
    %112 = vector.broadcast %cst_34 : f32 to vector<2x128xf32>
    %113 = arith.addf %112, %111 : vector<2x128xf32>
    %114 = arith.divf %112, %113 : vector<2x128xf32>
    %115 = vector.extract_strided_slice %114 {offsets = [0, 0], sizes = [2, 32], strides = [1, 1]} : vector<2x128xf32> to vector<2x32xf32>
    %116 = vector.extract_strided_slice %114 {offsets = [0, 32], sizes = [2, 32], strides = [1, 1]} : vector<2x128xf32> to vector<2x32xf32>
    %117 = vector.extract_strided_slice %114 {offsets = [0, 96], sizes = [2, 32], strides = [1, 1]} : vector<2x128xf32> to vector<2x32xf32>
    %118 = vector.extract_strided_slice %109 {offsets = [0, 64], sizes = [2, 32], strides = [1, 1]} : vector<2x128xf32> to vector<2x32xf32>
    %119 = math.tanh %118 : vector<2x32xf32>
    %120 = arith.mulf %116, %100 : vector<2x32xf32>
    %121 = arith.mulf %115, %119 : vector<2x32xf32>
    %122 = arith.addf %120, %121 : vector<2x32xf32>
    %123 = math.tanh %122 : vector<2x32xf32>
    %124 = arith.mulf %117, %123 : vector<2x32xf32>
    %125 = vector.extract_strided_slice %124 {offsets = [0, 0], sizes = [1, 32], strides = [1, 1]} : vector<2x32xf32> to vector<1x32xf32>
    %c4_35 = arith.constant 4 : index
    %c0_36 = arith.constant 0 : index
    %126 = vector.load %arg3[%c4_35, %c0_36] : memref<28x32xf32, #tpu.memory_space<vmem>>, vector<1x32xf32>
    tpu.vector_store %arg3[%c4_35, %c0_36], %125 {strides = array<i32>} : memref<28x32xf32, #tpu.memory_space<vmem>>, vector<1x32xf32>,
    %127 = vector.extract_strided_slice %124 {offsets = [1, 0], sizes = [1, 32], strides = [1, 1]} : vector<2x32xf32> to vector<1x32xf32>
    %c18 = arith.constant 18 : index
    %c0_37 = arith.constant 0 : index
    %128 = vector.load %arg3[%c18, %c0_37] : memref<28x32xf32, #tpu.memory_space<vmem>>, vector<1x32xf32>
    tpu.vector_store %arg3[%c18, %c0_37], %127 {strides = array<i32>} : memref<28x32xf32, #tpu.memory_space<vmem>>, vector<1x32xf32>,
    %129 = vector.extract_strided_slice %16 {offsets = [10, 0], sizes = [2, 128], strides = [1, 1]} : vector<28x128xf32> to vector<2x128xf32>
    %cst_38 = arith.constant dense<0.000000e+00> : vector<2x128xf32>
    %130 = tpu.matmul %124, %0, %cst_38 {dimension_numbers = #tpu.dot_dimension_numbers<[1], [0], [0], [1], [0, 0, 1, 1], [], []>} : vector<2x32xf32>, vector<32x128xf32>, vector<2x128xf32> -> vector<2x128xf32>
    %131 = arith.addf %129, %130 : vector<2x128xf32>
    %132 = arith.negf %131 : vector<2x128xf32>
    %133 = math.exp %132 : vector<2x128xf32>
    %cst_39 = arith.constant 1.000000e+00 : f32
    %134 = vector.broadcast %cst_39 : f32 to vector<2x128xf32>
    %135 = arith.addf %134, %133 : vector<2x128xf32>
    %136 = arith.divf %134, %135 : vector<2x128xf32>
    %137 = vector.extract_strided_slice %136 {offsets = [0, 0], sizes = [2, 32], strides = [1, 1]} : vector<2x128xf32> to vector<2x32xf32>
    %138 = vector.extract_strided_slice %136 {offsets = [0, 32], sizes = [2, 32], strides = [1, 1]} : vector<2x128xf32> to vector<2x32xf32>
    %139 = vector.extract_strided_slice %136 {offsets = [0, 96], sizes = [2, 32], strides = [1, 1]} : vector<2x128xf32> to vector<2x32xf32>
    %140 = vector.extract_strided_slice %131 {offsets = [0, 64], sizes = [2, 32], strides = [1, 1]} : vector<2x128xf32> to vector<2x32xf32>
    %141 = math.tanh %140 : vector<2x32xf32>
    %142 = arith.mulf %138, %122 : vector<2x32xf32>
    %143 = arith.mulf %137, %141 : vector<2x32xf32>
    %144 = arith.addf %142, %143 : vector<2x32xf32>
    %145 = math.tanh %144 : vector<2x32xf32>
    %146 = arith.mulf %139, %145 : vector<2x32xf32>
    %147 = vector.extract_strided_slice %146 {offsets = [0, 0], sizes = [1, 32], strides = [1, 1]} : vector<2x32xf32> to vector<1x32xf32>
    %c5 = arith.constant 5 : index
    %c0_40 = arith.constant 0 : index
    %148 = vector.load %arg3[%c5, %c0_40] : memref<28x32xf32, #tpu.memory_space<vmem>>, vector<1x32xf32>
    tpu.vector_store %arg3[%c5, %c0_40], %147 {strides = array<i32>} : memref<28x32xf32, #tpu.memory_space<vmem>>, vector<1x32xf32>,
    %149 = vector.extract_strided_slice %146 {offsets = [1, 0], sizes = [1, 32], strides = [1, 1]} : vector<2x32xf32> to vector<1x32xf32>
    %c19 = arith.constant 19 : index
    %c0_41 = arith.constant 0 : index
    %150 = vector.load %arg3[%c19, %c0_41] : memref<28x32xf32, #tpu.memory_space<vmem>>, vector<1x32xf32>
    tpu.vector_store %arg3[%c19, %c0_41], %149 {strides = array<i32>} : memref<28x32xf32, #tpu.memory_space<vmem>>, vector<1x32xf32>,
    %151 = vector.extract_strided_slice %16 {offsets = [12, 0], sizes = [2, 128], strides = [1, 1]} : vector<28x128xf32> to vector<2x128xf32>
    %cst_42 = arith.constant dense<0.000000e+00> : vector<2x128xf32>
    %152 = tpu.matmul %146, %0, %cst_42 {dimension_numbers = #tpu.dot_dimension_numbers<[1], [0], [0], [1], [0, 0, 1, 1], [], []>} : vector<2x32xf32>, vector<32x128xf32>, vector<2x128xf32> -> vector<2x128xf32>
    %153 = arith.addf %151, %152 : vector<2x128xf32>
    %154 = arith.negf %153 : vector<2x128xf32>
    %155 = math.exp %154 : vector<2x128xf32>
    %cst_43 = arith.constant 1.000000e+00 : f32
    %156 = vector.broadcast %cst_43 : f32 to vector<2x128xf32>
    %157 = arith.addf %156, %155 : vector<2x128xf32>
    %158 = arith.divf %156, %157 : vector<2x128xf32>
    %159 = vector.extract_strided_slice %158 {offsets = [0, 0], sizes = [2, 32], strides = [1, 1]} : vector<2x128xf32> to vector<2x32xf32>
    %160 = vector.extract_strided_slice %158 {offsets = [0, 32], sizes = [2, 32], strides = [1, 1]} : vector<2x128xf32> to vector<2x32xf32>
    %161 = vector.extract_strided_slice %158 {offsets = [0, 96], sizes = [2, 32], strides = [1, 1]} : vector<2x128xf32> to vector<2x32xf32>
    %162 = vector.extract_strided_slice %153 {offsets = [0, 64], sizes = [2, 32], strides = [1, 1]} : vector<2x128xf32> to vector<2x32xf32>
    %163 = math.tanh %162 : vector<2x32xf32>
    %164 = arith.mulf %160, %144 : vector<2x32xf32>
    %165 = arith.mulf %159, %163 : vector<2x32xf32>
    %166 = arith.addf %164, %165 : vector<2x32xf32>
    %167 = math.tanh %166 : vector<2x32xf32>
    %168 = arith.mulf %161, %167 : vector<2x32xf32>
    %169 = vector.extract_strided_slice %168 {offsets = [0, 0], sizes = [1, 32], strides = [1, 1]} : vector<2x32xf32> to vector<1x32xf32>
    %c6 = arith.constant 6 : index
    %c0_44 = arith.constant 0 : index
    %170 = vector.load %arg3[%c6, %c0_44] : memref<28x32xf32, #tpu.memory_space<vmem>>, vector<1x32xf32>
    tpu.vector_store %arg3[%c6, %c0_44], %169 {strides = array<i32>} : memref<28x32xf32, #tpu.memory_space<vmem>>, vector<1x32xf32>,
    %171 = vector.extract_strided_slice %168 {offsets = [1, 0], sizes = [1, 32], strides = [1, 1]} : vector<2x32xf32> to vector<1x32xf32>
    %c20 = arith.constant 20 : index
    %c0_45 = arith.constant 0 : index
    %172 = vector.load %arg3[%c20, %c0_45] : memref<28x32xf32, #tpu.memory_space<vmem>>, vector<1x32xf32>
    tpu.vector_store %arg3[%c20, %c0_45], %171 {strides = array<i32>} : memref<28x32xf32, #tpu.memory_space<vmem>>, vector<1x32xf32>,
    %173 = vector.extract_strided_slice %16 {offsets = [14, 0], sizes = [2, 128], strides = [1, 1]} : vector<28x128xf32> to vector<2x128xf32>
    %cst_46 = arith.constant dense<0.000000e+00> : vector<2x128xf32>
    %174 = tpu.matmul %168, %0, %cst_46 {dimension_numbers = #tpu.dot_dimension_numbers<[1], [0], [0], [1], [0, 0, 1, 1], [], []>} : vector<2x32xf32>, vector<32x128xf32>, vector<2x128xf32> -> vector<2x128xf32>
    %175 = arith.addf %173, %174 : vector<2x128xf32>
    %176 = arith.negf %175 : vector<2x128xf32>
    %177 = math.exp %176 : vector<2x128xf32>
    %cst_47 = arith.constant 1.000000e+00 : f32
    %178 = vector.broadcast %cst_47 : f32 to vector<2x128xf32>
    %179 = arith.addf %178, %177 : vector<2x128xf32>
    %180 = arith.divf %178, %179 : vector<2x128xf32>
    %181 = vector.extract_strided_slice %180 {offsets = [0, 0], sizes = [2, 32], strides = [1, 1]} : vector<2x128xf32> to vector<2x32xf32>
    %182 = vector.extract_strided_slice %180 {offsets = [0, 32], sizes = [2, 32], strides = [1, 1]} : vector<2x128xf32> to vector<2x32xf32>
    %183 = vector.extract_strided_slice %180 {offsets = [0, 96], sizes = [2, 32], strides = [1, 1]} : vector<2x128xf32> to vector<2x32xf32>
    %184 = vector.extract_strided_slice %175 {offsets = [0, 64], sizes = [2, 32], strides = [1, 1]} : vector<2x128xf32> to vector<2x32xf32>
    %185 = math.tanh %184 : vector<2x32xf32>
    %186 = arith.mulf %182, %166 : vector<2x32xf32>
    %187 = arith.mulf %181, %185 : vector<2x32xf32>
    %188 = arith.addf %186, %187 : vector<2x32xf32>
    %189 = math.tanh %188 : vector<2x32xf32>
    %190 = arith.mulf %183, %189 : vector<2x32xf32>
    %191 = vector.extract_strided_slice %190 {offsets = [0, 0], sizes = [1, 32], strides = [1, 1]} : vector<2x32xf32> to vector<1x32xf32>
    %c7 = arith.constant 7 : index
    %c0_48 = arith.constant 0 : index
    %192 = vector.load %arg3[%c7, %c0_48] : memref<28x32xf32, #tpu.memory_space<vmem>>, vector<1x32xf32>
    tpu.vector_store %arg3[%c7, %c0_48], %191 {strides = array<i32>} : memref<28x32xf32, #tpu.memory_space<vmem>>, vector<1x32xf32>,
    %193 = vector.extract_strided_slice %190 {offsets = [1, 0], sizes = [1, 32], strides = [1, 1]} : vector<2x32xf32> to vector<1x32xf32>
    %c21 = arith.constant 21 : index
    %c0_49 = arith.constant 0 : index
    %194 = vector.load %arg3[%c21, %c0_49] : memref<28x32xf32, #tpu.memory_space<vmem>>, vector<1x32xf32>
    tpu.vector_store %arg3[%c21, %c0_49], %193 {strides = array<i32>} : memref<28x32xf32, #tpu.memory_space<vmem>>, vector<1x32xf32>,
    %195 = vector.extract_strided_slice %16 {offsets = [16, 0], sizes = [2, 128], strides = [1, 1]} : vector<28x128xf32> to vector<2x128xf32>
    %cst_50 = arith.constant dense<0.000000e+00> : vector<2x128xf32>
    %196 = tpu.matmul %190, %0, %cst_50 {dimension_numbers = #tpu.dot_dimension_numbers<[1], [0], [0], [1], [0, 0, 1, 1], [], []>} : vector<2x32xf32>, vector<32x128xf32>, vector<2x128xf32> -> vector<2x128xf32>
    %197 = arith.addf %195, %196 : vector<2x128xf32>
    %198 = arith.negf %197 : vector<2x128xf32>
    %199 = math.exp %198 : vector<2x128xf32>
    %cst_51 = arith.constant 1.000000e+00 : f32
    %200 = vector.broadcast %cst_51 : f32 to vector<2x128xf32>
    %201 = arith.addf %200, %199 : vector<2x128xf32>
    %202 = arith.divf %200, %201 : vector<2x128xf32>
    %203 = vector.extract_strided_slice %202 {offsets = [0, 0], sizes = [2, 32], strides = [1, 1]} : vector<2x128xf32> to vector<2x32xf32>
    %204 = vector.extract_strided_slice %202 {offsets = [0, 32], sizes = [2, 32], strides = [1, 1]} : vector<2x128xf32> to vector<2x32xf32>
    %205 = vector.extract_strided_slice %202 {offsets = [0, 96], sizes = [2, 32], strides = [1, 1]} : vector<2x128xf32> to vector<2x32xf32>
    %206 = vector.extract_strided_slice %197 {offsets = [0, 64], sizes = [2, 32], strides = [1, 1]} : vector<2x128xf32> to vector<2x32xf32>
    %207 = math.tanh %206 : vector<2x32xf32>
    %208 = arith.mulf %204, %188 : vector<2x32xf32>
    %209 = arith.mulf %203, %207 : vector<2x32xf32>
    %210 = arith.addf %208, %209 : vector<2x32xf32>
    %211 = math.tanh %210 : vector<2x32xf32>
    %212 = arith.mulf %205, %211 : vector<2x32xf32>
    %213 = vector.extract_strided_slice %212 {offsets = [0, 0], sizes = [1, 32], strides = [1, 1]} : vector<2x32xf32> to vector<1x32xf32>
    %c8 = arith.constant 8 : index
    %c0_52 = arith.constant 0 : index
    %214 = vector.load %arg3[%c8, %c0_52] : memref<28x32xf32, #tpu.memory_space<vmem>>, vector<1x32xf32>
    tpu.vector_store %arg3[%c8, %c0_52], %213 {strides = array<i32>} : memref<28x32xf32, #tpu.memory_space<vmem>>, vector<1x32xf32>,
    %215 = vector.extract_strided_slice %212 {offsets = [1, 0], sizes = [1, 32], strides = [1, 1]} : vector<2x32xf32> to vector<1x32xf32>
    %c22 = arith.constant 22 : index
    %c0_53 = arith.constant 0 : index
    %216 = vector.load %arg3[%c22, %c0_53] : memref<28x32xf32, #tpu.memory_space<vmem>>, vector<1x32xf32>
    tpu.vector_store %arg3[%c22, %c0_53], %215 {strides = array<i32>} : memref<28x32xf32, #tpu.memory_space<vmem>>, vector<1x32xf32>,
    %217 = vector.extract_strided_slice %16 {offsets = [18, 0], sizes = [2, 128], strides = [1, 1]} : vector<28x128xf32> to vector<2x128xf32>
    %cst_54 = arith.constant dense<0.000000e+00> : vector<2x128xf32>
    %218 = tpu.matmul %212, %0, %cst_54 {dimension_numbers = #tpu.dot_dimension_numbers<[1], [0], [0], [1], [0, 0, 1, 1], [], []>} : vector<2x32xf32>, vector<32x128xf32>, vector<2x128xf32> -> vector<2x128xf32>
    %219 = arith.addf %217, %218 : vector<2x128xf32>
    %220 = arith.negf %219 : vector<2x128xf32>
    %221 = math.exp %220 : vector<2x128xf32>
    %cst_55 = arith.constant 1.000000e+00 : f32
    %222 = vector.broadcast %cst_55 : f32 to vector<2x128xf32>
    %223 = arith.addf %222, %221 : vector<2x128xf32>
    %224 = arith.divf %222, %223 : vector<2x128xf32>
    %225 = vector.extract_strided_slice %224 {offsets = [0, 0], sizes = [2, 32], strides = [1, 1]} : vector<2x128xf32> to vector<2x32xf32>
    %226 = vector.extract_strided_slice %224 {offsets = [0, 32], sizes = [2, 32], strides = [1, 1]} : vector<2x128xf32> to vector<2x32xf32>
    %227 = vector.extract_strided_slice %224 {offsets = [0, 96], sizes = [2, 32], strides = [1, 1]} : vector<2x128xf32> to vector<2x32xf32>
    %228 = vector.extract_strided_slice %219 {offsets = [0, 64], sizes = [2, 32], strides = [1, 1]} : vector<2x128xf32> to vector<2x32xf32>
    %229 = math.tanh %228 : vector<2x32xf32>
    %230 = arith.mulf %226, %210 : vector<2x32xf32>
    %231 = arith.mulf %225, %229 : vector<2x32xf32>
    %232 = arith.addf %230, %231 : vector<2x32xf32>
    %233 = math.tanh %232 : vector<2x32xf32>
    %234 = arith.mulf %227, %233 : vector<2x32xf32>
    %235 = vector.extract_strided_slice %234 {offsets = [0, 0], sizes = [1, 32], strides = [1, 1]} : vector<2x32xf32> to vector<1x32xf32>
    %c9 = arith.constant 9 : index
    %c0_56 = arith.constant 0 : index
    %236 = vector.load %arg3[%c9, %c0_56] : memref<28x32xf32, #tpu.memory_space<vmem>>, vector<1x32xf32>
    tpu.vector_store %arg3[%c9, %c0_56], %235 {strides = array<i32>} : memref<28x32xf32, #tpu.memory_space<vmem>>, vector<1x32xf32>,
    %237 = vector.extract_strided_slice %234 {offsets = [1, 0], sizes = [1, 32], strides = [1, 1]} : vector<2x32xf32> to vector<1x32xf32>
    %c23 = arith.constant 23 : index
    %c0_57 = arith.constant 0 : index
    %238 = vector.load %arg3[%c23, %c0_57] : memref<28x32xf32, #tpu.memory_space<vmem>>, vector<1x32xf32>
    tpu.vector_store %arg3[%c23, %c0_57], %237 {strides = array<i32>} : memref<28x32xf32, #tpu.memory_space<vmem>>, vector<1x32xf32>,
    %239 = vector.extract_strided_slice %16 {offsets = [20, 0], sizes = [2, 128], strides = [1, 1]} : vector<28x128xf32> to vector<2x128xf32>
    %cst_58 = arith.constant dense<0.000000e+00> : vector<2x128xf32>
    %240 = tpu.matmul %234, %0, %cst_58 {dimension_numbers = #tpu.dot_dimension_numbers<[1], [0], [0], [1], [0, 0, 1, 1], [], []>} : vector<2x32xf32>, vector<32x128xf32>, vector<2x128xf32> -> vector<2x128xf32>
    %241 = arith.addf %239, %240 : vector<2x128xf32>
    %242 = arith.negf %241 : vector<2x128xf32>
    %243 = math.exp %242 : vector<2x128xf32>
    %cst_59 = arith.constant 1.000000e+00 : f32
    %244 = vector.broadcast %cst_59 : f32 to vector<2x128xf32>
    %245 = arith.addf %244, %243 : vector<2x128xf32>
    %246 = arith.divf %244, %245 : vector<2x128xf32>
    %247 = vector.extract_strided_slice %246 {offsets = [0, 0], sizes = [2, 32], strides = [1, 1]} : vector<2x128xf32> to vector<2x32xf32>
    %248 = vector.extract_strided_slice %246 {offsets = [0, 32], sizes = [2, 32], strides = [1, 1]} : vector<2x128xf32> to vector<2x32xf32>
    %249 = vector.extract_strided_slice %246 {offsets = [0, 96], sizes = [2, 32], strides = [1, 1]} : vector<2x128xf32> to vector<2x32xf32>
    %250 = vector.extract_strided_slice %241 {offsets = [0, 64], sizes = [2, 32], strides = [1, 1]} : vector<2x128xf32> to vector<2x32xf32>
    %251 = math.tanh %250 : vector<2x32xf32>
    %252 = arith.mulf %248, %232 : vector<2x32xf32>
    %253 = arith.mulf %247, %251 : vector<2x32xf32>
    %254 = arith.addf %252, %253 : vector<2x32xf32>
    %255 = math.tanh %254 : vector<2x32xf32>
    %256 = arith.mulf %249, %255 : vector<2x32xf32>
    %257 = vector.extract_strided_slice %256 {offsets = [0, 0], sizes = [1, 32], strides = [1, 1]} : vector<2x32xf32> to vector<1x32xf32>
    %c10 = arith.constant 10 : index
    %c0_60 = arith.constant 0 : index
    %258 = vector.load %arg3[%c10, %c0_60] : memref<28x32xf32, #tpu.memory_space<vmem>>, vector<1x32xf32>
    tpu.vector_store %arg3[%c10, %c0_60], %257 {strides = array<i32>} : memref<28x32xf32, #tpu.memory_space<vmem>>, vector<1x32xf32>,
    %259 = vector.extract_strided_slice %256 {offsets = [1, 0], sizes = [1, 32], strides = [1, 1]} : vector<2x32xf32> to vector<1x32xf32>
    %c24 = arith.constant 24 : index
    %c0_61 = arith.constant 0 : index
    %260 = vector.load %arg3[%c24, %c0_61] : memref<28x32xf32, #tpu.memory_space<vmem>>, vector<1x32xf32>
    tpu.vector_store %arg3[%c24, %c0_61], %259 {strides = array<i32>} : memref<28x32xf32, #tpu.memory_space<vmem>>, vector<1x32xf32>,
    %261 = vector.extract_strided_slice %16 {offsets = [22, 0], sizes = [2, 128], strides = [1, 1]} : vector<28x128xf32> to vector<2x128xf32>
    %cst_62 = arith.constant dense<0.000000e+00> : vector<2x128xf32>
    %262 = tpu.matmul %256, %0, %cst_62 {dimension_numbers = #tpu.dot_dimension_numbers<[1], [0], [0], [1], [0, 0, 1, 1], [], []>} : vector<2x32xf32>, vector<32x128xf32>, vector<2x128xf32> -> vector<2x128xf32>
    %263 = arith.addf %261, %262 : vector<2x128xf32>
    %264 = arith.negf %263 : vector<2x128xf32>
    %265 = math.exp %264 : vector<2x128xf32>
    %cst_63 = arith.constant 1.000000e+00 : f32
    %266 = vector.broadcast %cst_63 : f32 to vector<2x128xf32>
    %267 = arith.addf %266, %265 : vector<2x128xf32>
    %268 = arith.divf %266, %267 : vector<2x128xf32>
    %269 = vector.extract_strided_slice %268 {offsets = [0, 0], sizes = [2, 32], strides = [1, 1]} : vector<2x128xf32> to vector<2x32xf32>
    %270 = vector.extract_strided_slice %268 {offsets = [0, 32], sizes = [2, 32], strides = [1, 1]} : vector<2x128xf32> to vector<2x32xf32>
    %271 = vector.extract_strided_slice %268 {offsets = [0, 96], sizes = [2, 32], strides = [1, 1]} : vector<2x128xf32> to vector<2x32xf32>
    %272 = vector.extract_strided_slice %263 {offsets = [0, 64], sizes = [2, 32], strides = [1, 1]} : vector<2x128xf32> to vector<2x32xf32>
    %273 = math.tanh %272 : vector<2x32xf32>
    %274 = arith.mulf %270, %254 : vector<2x32xf32>
    %275 = arith.mulf %269, %273 : vector<2x32xf32>
    %276 = arith.addf %274, %275 : vector<2x32xf32>
    %277 = math.tanh %276 : vector<2x32xf32>
    %278 = arith.mulf %271, %277 : vector<2x32xf32>
    %279 = vector.extract_strided_slice %278 {offsets = [0, 0], sizes = [1, 32], strides = [1, 1]} : vector<2x32xf32> to vector<1x32xf32>
    %c11 = arith.constant 11 : index
    %c0_64 = arith.constant 0 : index
    %280 = vector.load %arg3[%c11, %c0_64] : memref<28x32xf32, #tpu.memory_space<vmem>>, vector<1x32xf32>
    tpu.vector_store %arg3[%c11, %c0_64], %279 {strides = array<i32>} : memref<28x32xf32, #tpu.memory_space<vmem>>, vector<1x32xf32>,
    %281 = vector.extract_strided_slice %278 {offsets = [1, 0], sizes = [1, 32], strides = [1, 1]} : vector<2x32xf32> to vector<1x32xf32>
    %c25 = arith.constant 25 : index
    %c0_65 = arith.constant 0 : index
    %282 = vector.load %arg3[%c25, %c0_65] : memref<28x32xf32, #tpu.memory_space<vmem>>, vector<1x32xf32>
    tpu.vector_store %arg3[%c25, %c0_65], %281 {strides = array<i32>} : memref<28x32xf32, #tpu.memory_space<vmem>>, vector<1x32xf32>,
    %283 = vector.extract_strided_slice %16 {offsets = [24, 0], sizes = [2, 128], strides = [1, 1]} : vector<28x128xf32> to vector<2x128xf32>
    %cst_66 = arith.constant dense<0.000000e+00> : vector<2x128xf32>
    %284 = tpu.matmul %278, %0, %cst_66 {dimension_numbers = #tpu.dot_dimension_numbers<[1], [0], [0], [1], [0, 0, 1, 1], [], []>} : vector<2x32xf32>, vector<32x128xf32>, vector<2x128xf32> -> vector<2x128xf32>
    %285 = arith.addf %283, %284 : vector<2x128xf32>
    %286 = arith.negf %285 : vector<2x128xf32>
    %287 = math.exp %286 : vector<2x128xf32>
    %cst_67 = arith.constant 1.000000e+00 : f32
    %288 = vector.broadcast %cst_67 : f32 to vector<2x128xf32>
    %289 = arith.addf %288, %287 : vector<2x128xf32>
    %290 = arith.divf %288, %289 : vector<2x128xf32>
    %291 = vector.extract_strided_slice %290 {offsets = [0, 0], sizes = [2, 32], strides = [1, 1]} : vector<2x128xf32> to vector<2x32xf32>
    %292 = vector.extract_strided_slice %290 {offsets = [0, 32], sizes = [2, 32], strides = [1, 1]} : vector<2x128xf32> to vector<2x32xf32>
    %293 = vector.extract_strided_slice %290 {offsets = [0, 96], sizes = [2, 32], strides = [1, 1]} : vector<2x128xf32> to vector<2x32xf32>
    %294 = vector.extract_strided_slice %285 {offsets = [0, 64], sizes = [2, 32], strides = [1, 1]} : vector<2x128xf32> to vector<2x32xf32>
    %295 = math.tanh %294 : vector<2x32xf32>
    %296 = arith.mulf %292, %276 : vector<2x32xf32>
    %297 = arith.mulf %291, %295 : vector<2x32xf32>
    %298 = arith.addf %296, %297 : vector<2x32xf32>
    %299 = math.tanh %298 : vector<2x32xf32>
    %300 = arith.mulf %293, %299 : vector<2x32xf32>
    %301 = vector.extract_strided_slice %300 {offsets = [0, 0], sizes = [1, 32], strides = [1, 1]} : vector<2x32xf32> to vector<1x32xf32>
    %c12 = arith.constant 12 : index
    %c0_68 = arith.constant 0 : index
    %302 = vector.load %arg3[%c12, %c0_68] : memref<28x32xf32, #tpu.memory_space<vmem>>, vector<1x32xf32>
    tpu.vector_store %arg3[%c12, %c0_68], %301 {strides = array<i32>} : memref<28x32xf32, #tpu.memory_space<vmem>>, vector<1x32xf32>,
    %303 = vector.extract_strided_slice %300 {offsets = [1, 0], sizes = [1, 32], strides = [1, 1]} : vector<2x32xf32> to vector<1x32xf32>
    %c26 = arith.constant 26 : index
    %c0_69 = arith.constant 0 : index
    %304 = vector.load %arg3[%c26, %c0_69] : memref<28x32xf32, #tpu.memory_space<vmem>>, vector<1x32xf32>
    tpu.vector_store %arg3[%c26, %c0_69], %303 {strides = array<i32>} : memref<28x32xf32, #tpu.memory_space<vmem>>, vector<1x32xf32>,
    %305 = vector.extract_strided_slice %16 {offsets = [26, 0], sizes = [2, 128], strides = [1, 1]} : vector<28x128xf32> to vector<2x128xf32>
    %cst_70 = arith.constant dense<0.000000e+00> : vector<2x128xf32>
    %306 = tpu.matmul %300, %0, %cst_70 {dimension_numbers = #tpu.dot_dimension_numbers<[1], [0], [0], [1], [0, 0, 1, 1], [], []>} : vector<2x32xf32>, vector<32x128xf32>, vector<2x128xf32> -> vector<2x128xf32>
    %307 = arith.addf %305, %306 : vector<2x128xf32>
    %308 = arith.negf %307 : vector<2x128xf32>
    %309 = math.exp %308 : vector<2x128xf32>
    %cst_71 = arith.constant 1.000000e+00 : f32
    %310 = vector.broadcast %cst_71 : f32 to vector<2x128xf32>
    %311 = arith.addf %310, %309 : vector<2x128xf32>
    %312 = arith.divf %310, %311 : vector<2x128xf32>
    %313 = vector.extract_strided_slice %312 {offsets = [0, 0], sizes = [2, 32], strides = [1, 1]} : vector<2x128xf32> to vector<2x32xf32>
    %314 = vector.extract_strided_slice %312 {offsets = [0, 32], sizes = [2, 32], strides = [1, 1]} : vector<2x128xf32> to vector<2x32xf32>
    %315 = vector.extract_strided_slice %312 {offsets = [0, 96], sizes = [2, 32], strides = [1, 1]} : vector<2x128xf32> to vector<2x32xf32>
    %316 = vector.extract_strided_slice %307 {offsets = [0, 64], sizes = [2, 32], strides = [1, 1]} : vector<2x128xf32> to vector<2x32xf32>
    %317 = math.tanh %316 : vector<2x32xf32>
    %318 = arith.mulf %314, %298 : vector<2x32xf32>
    %319 = arith.mulf %313, %317 : vector<2x32xf32>
    %320 = arith.addf %318, %319 : vector<2x32xf32>
    %321 = math.tanh %320 : vector<2x32xf32>
    %322 = arith.mulf %315, %321 : vector<2x32xf32>
    %323 = vector.extract_strided_slice %322 {offsets = [0, 0], sizes = [1, 32], strides = [1, 1]} : vector<2x32xf32> to vector<1x32xf32>
    %c13 = arith.constant 13 : index
    %c0_72 = arith.constant 0 : index
    %324 = vector.load %arg3[%c13, %c0_72] : memref<28x32xf32, #tpu.memory_space<vmem>>, vector<1x32xf32>
    tpu.vector_store %arg3[%c13, %c0_72], %323 {strides = array<i32>} : memref<28x32xf32, #tpu.memory_space<vmem>>, vector<1x32xf32>,
    %325 = vector.extract_strided_slice %322 {offsets = [1, 0], sizes = [1, 32], strides = [1, 1]} : vector<2x32xf32> to vector<1x32xf32>
    %c27 = arith.constant 27 : index
    %c0_73 = arith.constant 0 : index
    %326 = vector.load %arg3[%c27, %c0_73] : memref<28x32xf32, #tpu.memory_space<vmem>>, vector<1x32xf32>
    tpu.vector_store %arg3[%c27, %c0_73], %325 {strides = array<i32>} : memref<28x32xf32, #tpu.memory_space<vmem>>, vector<1x32xf32>,
    %c32_74 = arith.constant 32 : index
    %c0_75 = arith.constant 0 : index
    %327 = vector.load %arg0[%c32_74, %c0_75] : memref<96x32xf32, #tpu.memory_space<vmem>>, vector<32x32xf32>
    %cst_76 = arith.constant dense<0.000000e+00> : vector<32x128xf32>
    %328 = tpu.matmul %327, %1, %cst_76 {dimension_numbers = #tpu.dot_dimension_numbers<[1], [0], [0], [1], [0, 0, 1, 1], [], []>} : vector<32x32xf32>, vector<32x128xf32>, vector<32x128xf32> -> vector<32x128xf32>
    %329 = vector.broadcast %3 : vector<1x128xf32> to vector<32x128xf32>
    %330 = arith.addf %328, %329 : vector<32x128xf32>
    %c0_77 = arith.constant 0 : index
    %c0_78 = arith.constant 0 : index
    %331 = vector.load %arg3[%c0_77, %c0_78] : memref<28x32xf32, #tpu.memory_space<vmem>>, vector<14x32xf32>
    %cst_79 = arith.constant dense<0.000000e+00> : vector<14x128xf32>
    %332 = tpu.matmul %331, %1, %cst_79 {dimension_numbers = #tpu.dot_dimension_numbers<[1], [0], [0], [1], [0, 0, 1, 1], [], []>} : vector<14x32xf32>, vector<32x128xf32>, vector<14x128xf32> -> vector<14x128xf32>
    %333 = vector.broadcast %3 : vector<1x128xf32> to vector<14x128xf32>
    %334 = arith.addf %332, %333 : vector<14x128xf32>
    %cst_80 = arith.constant dense<0xFF800000> : vector<128xf32>
    %335 = vector.multi_reduction <maximumf>, %330, %cst_80 [0] : vector<32x128xf32> to vector<128xf32>
    %336 = vector.shape_cast %335 : vector<128xf32> to vector<1x128xf32>
    %cst_81 = arith.constant dense<0xFF800000> : vector<128xf32>
    %337 = vector.multi_reduction <maximumf>, %334, %cst_81 [0] : vector<14x128xf32> to vector<128xf32>
    %338 = vector.shape_cast %337 : vector<128xf32> to vector<1x128xf32>
    %339 = arith.maximumf %336, %338 : vector<1x128xf32>
    %340 = vector.broadcast %339 : vector<1x128xf32> to vector<32x128xf32>
    %341 = arith.subf %330, %340 : vector<32x128xf32>
    %342 = math.exp %341 : vector<32x128xf32>
    %cst_82 = arith.constant dense<0.000000e+00> : vector<128xf32>
    %343 = vector.multi_reduction <add>, %342, %cst_82 [0] : vector<32x128xf32> to vector<128xf32>
    %344 = vector.shape_cast %343 : vector<128xf32> to vector<1x128xf32>
    %345 = vector.broadcast %339 : vector<1x128xf32> to vector<14x128xf32>
    %346 = arith.subf %334, %345 : vector<14x128xf32>
    %347 = math.exp %346 : vector<14x128xf32>
    %cst_83 = arith.constant dense<0.000000e+00> : vector<128xf32>
    %348 = vector.multi_reduction <add>, %347, %cst_83 [0] : vector<14x128xf32> to vector<128xf32>
    %349 = vector.shape_cast %348 : vector<128xf32> to vector<1x128xf32>
    %350 = arith.addf %344, %349 : vector<1x128xf32>
    %cst_84 = arith.constant dense<0x7F800000> : vector<1xf32>
    %351 = vector.multi_reduction <minimumf>, %350, %cst_84 [1] : vector<1x128xf32> to vector<1xf32>
    %352 = vector.shape_cast %351 : vector<1xf32> to vector<1x1xf32>
    %353 = tpu.reciprocal %352 {approx = true} : vector<1x1xf32> -> vector<1x1xf32>
    %c0_85 = arith.constant 0 : index
    %c0_86 = arith.constant 0 : index
    %354 = vector.load %arg2[%c0_85, %c0_86] : memref<2x1xf32, #tpu.memory_space<vmem>>, vector<1x1xf32>
    tpu.vector_store %arg2[%c0_85, %c0_86], %353 {strides = array<i32>} : memref<2x1xf32, #tpu.memory_space<vmem>>, vector<1x1xf32>,
    %c64_87 = arith.constant 64 : index
    %c0_88 = arith.constant 0 : index
    %355 = vector.load %arg0[%c64_87, %c0_88] : memref<96x32xf32, #tpu.memory_space<vmem>>, vector<32x32xf32>
    %cst_89 = arith.constant dense<0.000000e+00> : vector<32x128xf32>
    %356 = tpu.matmul %355, %1, %cst_89 {dimension_numbers = #tpu.dot_dimension_numbers<[1], [0], [0], [1], [0, 0, 1, 1], [], []>} : vector<32x32xf32>, vector<32x128xf32>, vector<32x128xf32> -> vector<32x128xf32>
    %357 = vector.broadcast %3 : vector<1x128xf32> to vector<32x128xf32>
    %358 = arith.addf %356, %357 : vector<32x128xf32>
    %c14_90 = arith.constant 14 : index
    %c0_91 = arith.constant 0 : index
    %359 = vector.load %arg3[%c14_90, %c0_91] : memref<28x32xf32, #tpu.memory_space<vmem>>, vector<14x32xf32>
    %cst_92 = arith.constant dense<0.000000e+00> : vector<14x128xf32>
    %360 = tpu.matmul %359, %1, %cst_92 {dimension_numbers = #tpu.dot_dimension_numbers<[1], [0], [0], [1], [0, 0, 1, 1], [], []>} : vector<14x32xf32>, vector<32x128xf32>, vector<14x128xf32> -> vector<14x128xf32>
    %361 = vector.broadcast %3 : vector<1x128xf32> to vector<14x128xf32>
    %362 = arith.addf %360, %361 : vector<14x128xf32>
    %cst_93 = arith.constant dense<0xFF800000> : vector<128xf32>
    %363 = vector.multi_reduction <maximumf>, %358, %cst_93 [0] : vector<32x128xf32> to vector<128xf32>
    %364 = vector.shape_cast %363 : vector<128xf32> to vector<1x128xf32>
    %cst_94 = arith.constant dense<0xFF800000> : vector<128xf32>
    %365 = vector.multi_reduction <maximumf>, %362, %cst_94 [0] : vector<14x128xf32> to vector<128xf32>
    %366 = vector.shape_cast %365 : vector<128xf32> to vector<1x128xf32>
    %367 = arith.maximumf %364, %366 : vector<1x128xf32>
    %368 = vector.broadcast %367 : vector<1x128xf32> to vector<32x128xf32>
    %369 = arith.subf %358, %368 : vector<32x128xf32>
    %370 = math.exp %369 : vector<32x128xf32>
    %cst_95 = arith.constant dense<0.000000e+00> : vector<128xf32>
    %371 = vector.multi_reduction <add>, %370, %cst_95 [0] : vector<32x128xf32> to vector<128xf32>
    %372 = vector.shape_cast %371 : vector<128xf32> to vector<1x128xf32>
    %373 = vector.broadcast %367 : vector<1x128xf32> to vector<14x128xf32>
    %374 = arith.subf %362, %373 : vector<14x128xf32>
    %375 = math.exp %374 : vector<14x128xf32>
    %cst_96 = arith.constant dense<0.000000e+00> : vector<128xf32>
    %376 = vector.multi_reduction <add>, %375, %cst_96 [0] : vector<14x128xf32> to vector<128xf32>
    %377 = vector.shape_cast %376 : vector<128xf32> to vector<1x128xf32>
    %378 = arith.addf %372, %377 : vector<1x128xf32>
    %cst_97 = arith.constant dense<0x7F800000> : vector<1xf32>
    %379 = vector.multi_reduction <minimumf>, %378, %cst_97 [1] : vector<1x128xf32> to vector<1xf32>
    %380 = vector.shape_cast %379 : vector<1xf32> to vector<1x1xf32>
    %381 = tpu.reciprocal %380 {approx = true} : vector<1x1xf32> -> vector<1x1xf32>
    %c1_98 = arith.constant 1 : index
    %c0_99 = arith.constant 0 : index
    %382 = vector.load %arg2[%c1_98, %c0_99] : memref<2x1xf32, #tpu.memory_space<vmem>>, vector<1x1xf32>
    tpu.vector_store %arg2[%c1_98, %c0_99], %381 {strides = array<i32>} : memref<2x1xf32, #tpu.memory_space<vmem>>, vector<1x1xf32>,
    return
  }
}

</mosaic_0001>

<llo_original>
// kernel: tpu_custom_call.1
$region0: #{tpu_custom_call.1}
  #allocation0 [shape = 'u32[]', space=smem, size = 0x4, offset = 0x4, fixed_abs, tag = 'smem constant byte address 0x4 - core index']
  #allocation1 [shape = 'u32[144,128]{1,0:T(1,128)}', space=vmem, size = 0x12000, scoped, tag = 'internal scratch']
  #allocation2 [shape = 'f32[28,32]{1,0:T(8,128)}', space=vmem, size = 0x4000, scoped, tag = 'scratch operand']
  %s0 = inlined_call_operand.vmem [shape: f32[96,32], index: 0, kind: input, shape index: {}]
  %s1 = inlined_call_operand.hbm [shape: f32[162,128], index: 1, kind: input, shape index: {}]
  %s2 = inlined_call_operand.vmem [shape: f32[2,1], index: 2, kind: output, shape index: {}]
  %s3 = sld [smem:[#allocation0]]
  $region22: #{tpu_custom_call.1} parent=0
    _
  %s5 = ssub.s32 1, %s3
  %s6 = scalar_select 0, %s5, %s3
  $region1: #{tpu_custom_call.1} parent=0
    #allocation3 [shape = 'u8[86016]{0}', space=vmem, size = 0x15000, scoped, tag = 'input window, operand 1, single buffered']
    #allocation4 [shape = 's32[1]{0}', space=sflag, size = 0x4, scoped, tag = 'scoped memory for tpu_custom_call.1']
    %7 = vsyncpa [#allocation4], 0
    // Predicated region
    $region2: #{tpu_custom_call.1} parent=1 // pred_check
      _
    $region3: #{tpu_custom_call.1} parent=1 // pred_check_branch
      %9 = sbr.rel (0) target = $region5
    $region4: #{tpu_custom_call.1} parent=1 // pred_region
      _
    $region5: #{tpu_custom_call.1} parent=1 // pred_fallthru
      _
    // Predicated region
    $region6: #{tpu_custom_call.1} parent=1 // pred_check
      _
    $region7: #{tpu_custom_call.1} parent=1 // pred_check_branch
      %11 = sbr.rel (0) target = $region9
    $region8: #{tpu_custom_call.1} parent=1 // pred_region
      %s13 = ssub.s32 2688, 2688
      %14 = vsyncadd [#allocation4], %s13
      %s15 = sshll.u32 [#allocation3], 4
      %s16 = int_to_ptr.vmem [resolvable:$true] %s15
      %21 = dma.hbm_to_vmem [thread:$0]  %s1, 2688, %s16, [#allocation4], 128, 128, 8
    $region9: #{tpu_custom_call.1} parent=1 // pred_fallthru
      _
    // Predicated region
    $region10: #{tpu_custom_call.1} parent=1 // pred_check
      _
    $region11: #{tpu_custom_call.1} parent=1 // pred_check_branch
      %23 = sbr.rel (0) target = $region13
    $region12: #{tpu_custom_call.1} parent=1 // pred_region
      %24 = dma.done [#allocation4], 2688
    $region13: #{tpu_custom_call.1} parent=1 // pred_fallthru
      _
    %v25 = vld [vmem:[#allocation3 + $0x60] sm:$0xff]
    %v26 = vld [vmem:[#allocation3 + $0x68] sm:$0xff]
    %v27 = vld [vmem:[#allocation3 + $0x70] sm:$0xff]
    %v28 = vld [vmem:[#allocation3 + $0x78] sm:$0xff]
    %v29 = vld [vmem:[#allocation3 + $0x80] sm:$0xff]
    %v30 = vld [vmem:[#allocation3 + $0x88] sm:$0xff]
    %v31 = vld [vmem:[#allocation3 + $0x90] sm:$0xff]
    %v32 = vld [vmem:[#allocation3 + $0x98] sm:$0xff]
    %v33 = vld [vmem:[#allocation3 + $0xa0] sm:$0x1]
    %v34 = vld [vmem:[#allocation3 + $0xa1] sm:$0x1]
    %v35 = vld [vmem:[%s0] sm:$0xff]
    %v36 = vld [vmem:[%s0 + $0x8] sm:$0xff]
    %v37 = vld [vmem:[%s0 + $0x10] sm:$0xff]
    %v38 = vld [vmem:[%s0 + $0x18] sm:$0xf]
    %v39 = vld [vmem:[#allocation3] sm:$0xff]
    %v40 = vld [vmem:[#allocation3 + $0x8] sm:$0xff]
    %v41 = vld [vmem:[#allocation3 + $0x10] sm:$0xff]
    %v42 = vld [vmem:[#allocation3 + $0x18] sm:$0xff]
    %vm43 = vcmask 261120
    %v45 = vsel %vm43, %v35, 0
    %v48 = vsel %vm43, %v36, 0
    %v51 = vsel %vm43, %v37, 0
    %v54 = vsel %vm43, %v38, 0
    %56 = vmatprep.subr.mxu0 0.0
    %57 = vmatpush1.msra.mxu0 %v39
    %58 = vmatprep.subr.mxu0 0.0
    %59 = vmatpush1.msra.mxu0 %v40
    %60 = vmatprep.subr.mxu0 0.0
    %61 = vmatpush1.msra.mxu0 %v41
    %62 = vmatprep.subr.mxu0 0.0
    %63 = vmatpush1.msra.mxu0 %v42
    %64 = vmatprep.subr.mxu0 0.0
    %65 = vmatpush1.msra.mxu0 0.0
    %66 = vmatprep.subr.mxu0 0.0
    %67 = vmatpush1.msra.mxu0 0.0
    %68 = vmatprep.subr.mxu0 0.0
    %69 = vmatpush1.msra.mxu0 0.0
    %70 = vmatprep.subr.mxu0 0.0
    %71 = vmatpush1.msra.mxu0 0.0
    %72 = vmatprep.subr.mxu0 0.0
    %73 = vmatpush1.msra.mxu0 0.0
    %74 = vmatprep.subr.mxu0 0.0
    %75 = vmatpush1.msra.mxu0 0.0
    %76 = vmatprep.subr.mxu0 0.0
    %77 = vmatpush1.msra.mxu0 0.0
    %78 = vmatprep.subr.mxu0 0.0
    %79 = vmatpush1.msra.mxu0 0.0
    %80 = vmatprep.subr.mxu0 0.0
    %81 = vmatpush1.msra.mxu0 0.0
    %82 = vmatprep.subr.mxu0 0.0
    %83 = vmatpush1.msra.mxu0 0.0
    %84 = vmatprep.subr.mxu0 0.0
    %85 = vmatpush1.msra.mxu0 0.0
    %86 = vmatprep.subr.mxu0 0.0
    %87 = vmatpush1.msra.mxu0 0.0
    %88 = vmatprep.subr.mxu0 0.0
    %89 = vmatpush1.msra.mxu0 0.0
    %90 = vmatprep.subr.mxu0 0.0
    %91 = vmatpush1.msra.mxu0 0.0
    %92 = vmatprep.subr.mxu0 0.0
    %93 = vmatpush1.msra.mxu0 0.0
    %94 = vmatprep.subr.mxu0 0.0
    %95 = vmatpush1.msra.mxu0 0.0
    %96 = vmatprep.subr.mxu0 0.0
    %97 = vmatpush1.msra.mxu0 0.0
    %98 = vmatprep.subr.mxu0 0.0
    %99 = vmatpush1.msra.mxu0 0.0
    %100 = vmatprep.subr.mxu0 0.0
    %101 = vmatpush1.msra.mxu0 0.0
    %102 = vmatprep.subr.mxu0 0.0
    %103 = vmatpush1.msra.mxu0 0.0
    %104 = vmatprep.subr.mxu0 0.0
    %105 = vmatpush1.msra.mxu0 0.0
    %106 = vmatprep.subr.mxu0 0.0
    %107 = vmatpush1.msra.mxu0 0.0
    %108 = vmatprep.subr.mxu0 0.0
    %109 = vmatpush1.msra.mxu0 0.0
    %110 = vmatprep.subr.mxu0 0.0
    %111 = vmatpush1.msra.mxu0 0.0
    %112 = vmatprep.subr.mxu0 0.0
    %113 = vmatpush1.msra.mxu0 0.0
    %114 = vmatprep.subr.mxu0 0.0
    %115 = vmatpush1.msra.mxu0 0.0
    %116 = vmatprep.subr.mxu0 0.0
    %117 = vmatpush1.msra.mxu0 0.0
    %118 = vmatprep.subr.mxu0 0.0
    %119 = vmatpush1.msra.mxu0 0.0
    %120 = vmatprep.mubr.f32.mxu0 0.0
    %121 = vmatmul.mubr.f32.gmra.mrb[0].mxu0 %v45
    %v122 = vpop.f32.mrb[0].mxu0
    %v123 = vadd.f32 0.0, %v122
    %v124 = vpop.f32.mrb[0].mxu0
    %125 = vmatprep.mubr.f32.mxu0 0.0
    %126 = vmatmul.mubr.f32.gmra.mrb[0].mxu0 %v48
    %v127 = vpop.f32.mrb[0].mxu0
    %v128 = vadd.f32 0.0, %v127
    %v129 = vpop.f32.mrb[0].mxu0
    %130 = vmatprep.mubr.f32.mxu0 0.0
    %131 = vmatmul.mubr.f32.gmra.mrb[0].mxu0 %v51
    %v132 = vpop.f32.mrb[0].mxu0
    %v133 = vadd.f32 0.0, %v132
    %v134 = vpop.f32.mrb[0].mxu0
    %135 = vmatprep.mubr.f32.mxu0 0.0
    %136 = vmatmul.mubr.f32.gmra.mrb[0].mxu0 %v54
    %v137 = vpop.f32.mrb[0].mxu0
    %v138 = vadd.f32 0.0, %v137
    %v139 = vpop.f32.mrb[0].mxu0
    %140 = vdwg.mxu0
    %v141 = vlaneseq
    %v142 = vshrl.u32 %v141, 7
    %v143 = vsub.s32 0, %v142
    %v144 = vrot.slane %v33, %v143
    %v145 = vadd.f32 %v144, %v123
    %v146 = vadd.f32 %v144, %v128
    %v147 = vadd.f32 %v144, %v133
    %v148 = vadd.f32 %v144, %v138
    %v149 = vld [vmem:[%s0 + $0x2] sm:$0xff]
    %v150 = vld [vmem:[%s0 + $0xa] sm:$0xff]
    %v151 = vld [vmem:[%s0 + $0x12] sm:$0xff]
    %v152 = vld [vmem:[%s0 + $0x1a] sm:$0xf]
    %v153 = vld [vmem:[#allocation3 + $0x20] sm:$0xff]
    %v154 = vld [vmem:[#allocation3 + $0x28] sm:$0xff]
    %v155 = vld [vmem:[#allocation3 + $0x30] sm:$0xff]
    %v156 = vld [vmem:[#allocation3 + $0x38] sm:$0xff]
    %v158 = vsel %vm43, %v149, 0
    %v161 = vsel %vm43, %v150, 0
    %v164 = vsel %vm43, %v151, 0
    %v167 = vsel %vm43, %v152, 0
    %169 = vmatprep.subr.mxu0 0.0
    %170 = vmatpush1.msra.mxu0 %v153
    %171 = vmatprep.subr.mxu0 0.0
    %172 = vmatpush1.msra.mxu0 %v154
    %173 = vmatprep.subr.mxu0 0.0
    %174 = vmatpush1.msra.mxu0 %v155
    %175 = vmatprep.subr.mxu0 0.0
    %176 = vmatpush1.msra.mxu0 %v156
    %177 = vmatprep.subr.mxu0 0.0
    %178 = vmatpush1.msra.mxu0 0.0
    %179 = vmatprep.subr.mxu0 0.0
    %180 = vmatpush1.msra.mxu0 0.0
    %181 = vmatprep.subr.mxu0 0.0
    %182 = vmatpush1.msra.mxu0 0.0
    %183 = vmatprep.subr.mxu0 0.0
    %184 = vmatpush1.msra.mxu0 0.0
    %185 = vmatprep.subr.mxu0 0.0
    %186 = vmatpush1.msra.mxu0 0.0
    %187 = vmatprep.subr.mxu0 0.0
    %188 = vmatpush1.msra.mxu0 0.0
    %189 = vmatprep.subr.mxu0 0.0
    %190 = vmatpush1.msra.mxu0 0.0
    %191 = vmatprep.subr.mxu0 0.0
    %192 = vmatpush1.msra.mxu0 0.0
    %193 = vmatprep.subr.mxu0 0.0
    %194 = vmatpush1.msra.mxu0 0.0
    %195 = vmatprep.subr.mxu0 0.0
    %196 = vmatpush1.msra.mxu0 0.0
    %197 = vmatprep.subr.mxu0 0.0
    %198 = vmatpush1.msra.mxu0 0.0
    %199 = vmatprep.subr.mxu0 0.0
    %200 = vmatpush1.msra.mxu0 0.0
    %201 = vmatprep.subr.mxu0 0.0
    %202 = vmatpush1.msra.mxu0 0.0
    %203 = vmatprep.subr.mxu0 0.0
    %204 = vmatpush1.msra.mxu0 0.0
    %205 = vmatprep.subr.mxu0 0.0
    %206 = vmatpush1.msra.mxu0 0.0
    %207 = vmatprep.subr.mxu0 0.0
    %208 = vmatpush1.msra.mxu0 0.0
    %209 = vmatprep.subr.mxu0 0.0
    %210 = vmatpush1.msra.mxu0 0.0
    %211 = vmatprep.subr.mxu0 0.0
    %212 = vmatpush1.msra.mxu0 0.0
    %213 = vmatprep.subr.mxu0 0.0
    %214 = vmatpush1.msra.mxu0 0.0
    %215 = vmatprep.subr.mxu0 0.0
    %216 = vmatpush1.msra.mxu0 0.0
    %217 = vmatprep.subr.mxu0 0.0
    %218 = vmatpush1.msra.mxu0 0.0
    %219 = vmatprep.subr.mxu0 0.0
    %220 = vmatpush1.msra.mxu0 0.0
    %221 = vmatprep.subr.mxu0 0.0
    %222 = vmatpush1.msra.mxu0 0.0
    %223 = vmatprep.subr.mxu0 0.0
    %224 = vmatpush1.msra.mxu0 0.0
    %225 = vmatprep.subr.mxu0 0.0
    %226 = vmatpush1.msra.mxu0 0.0
    %227 = vmatprep.subr.mxu0 0.0
    %228 = vmatpush1.msra.mxu0 0.0
    %229 = vmatprep.subr.mxu0 0.0
    %230 = vmatpush1.msra.mxu0 0.0
    %231 = vmatprep.subr.mxu0 0.0
    %232 = vmatpush1.msra.mxu0 0.0
    %233 = vmatprep.mubr.f32.mxu0 0.0
    %234 = vmatmul.mubr.f32.gmra.mrb[0].mxu0 %v158
    %v235 = vpop.f32.mrb[0].mxu0
    %v236 = vadd.f32 0.0, %v235
    %v237 = vpop.f32.mrb[0].mxu0
    %238 = vmatprep.mubr.f32.mxu0 0.0
    %239 = vmatmul.mubr.f32.gmra.mrb[0].mxu0 %v161
    %v240 = vpop.f32.mrb[0].mxu0
    %v241 = vadd.f32 0.0, %v240
    %v242 = vpop.f32.mrb[0].mxu0
    %243 = vmatprep.mubr.f32.mxu0 0.0
    %244 = vmatmul.mubr.f32.gmra.mrb[0].mxu0 %v164
    %v245 = vpop.f32.mrb[0].mxu0
    %v246 = vadd.f32 0.0, %v245
    %v247 = vpop.f32.mrb[0].mxu0
    %248 = vmatprep.mubr.f32.mxu0 0.0
    %249 = vmatmul.mubr.f32.gmra.mrb[0].mxu0 %v167
    %v250 = vpop.f32.mrb[0].mxu0
    %v251 = vadd.f32 0.0, %v250
    %v252 = vpop.f32.mrb[0].mxu0
    %253 = vdwg.mxu0
    %v254 = vadd.f32 %v145, %v236
    %v255 = vadd.f32 %v146, %v241
    %v256 = vadd.f32 %v147, %v246
    %v257 = vadd.f32 %v148, %v251
    %v258 = vld [vmem:[%s0 + $0x4] sm:$0xff]
    %v259 = vld [vmem:[%s0 + $0xc] sm:$0xff]
    %v260 = vld [vmem:[%s0 + $0x14] sm:$0xff]
    %v261 = vld [vmem:[%s0 + $0x1c] sm:$0xf]
    %v262 = vld [vmem:[#allocation3 + $0x40] sm:$0xff]
    %v263 = vld [vmem:[#allocation3 + $0x48] sm:$0xff]
    %v264 = vld [vmem:[#allocation3 + $0x50] sm:$0xff]
    %v265 = vld [vmem:[#allocation3 + $0x58] sm:$0xff]
    %v267 = vsel %vm43, %v258, 0
    %v270 = vsel %vm43, %v259, 0
    %v273 = vsel %vm43, %v260, 0
    %v276 = vsel %vm43, %v261, 0
    %278 = vmatprep.subr.mxu0 0.0
    %279 = vmatpush1.msra.mxu0 %v262
    %280 = vmatprep.subr.mxu0 0.0
    %281 = vmatpush1.msra.mxu0 %v263
    %282 = vmatprep.subr.mxu0 0.0
    %283 = vmatpush1.msra.mxu0 %v264
    %284 = vmatprep.subr.mxu0 0.0
    %285 = vmatpush1.msra.mxu0 %v265
    %286 = vmatprep.subr.mxu0 0.0
    %287 = vmatpush1.msra.mxu0 0.0
    %288 = vmatprep.subr.mxu0 0.0
    %289 = vmatpush1.msra.mxu0 0.0
    %290 = vmatprep.subr.mxu0 0.0
    %291 = vmatpush1.msra.mxu0 0.0
    %292 = vmatprep.subr.mxu0 0.0
    %293 = vmatpush1.msra.mxu0 0.0
    %294 = vmatprep.subr.mxu0 0.0
    %295 = vmatpush1.msra.mxu0 0.0
    %296 = vmatprep.subr.mxu0 0.0
    %297 = vmatpush1.msra.mxu0 0.0
    %298 = vmatprep.subr.mxu0 0.0
    %299 = vmatpush1.msra.mxu0 0.0
    %300 = vmatprep.subr.mxu0 0.0
    %301 = vmatpush1.msra.mxu0 0.0
    %302 = vmatprep.subr.mxu0 0.0
    %303 = vmatpush1.msra.mxu0 0.0
    %304 = vmatprep.subr.mxu0 0.0
    %305 = vmatpush1.msra.mxu0 0.0
    %306 = vmatprep.subr.mxu0 0.0
    %307 = vmatpush1.msra.mxu0 0.0
    %308 = vmatprep.subr.mxu0 0.0
    %309 = vmatpush1.msra.mxu0 0.0
    %310 = vmatprep.subr.mxu0 0.0
    %311 = vmatpush1.msra.mxu0 0.0
    %312 = vmatprep.subr.mxu0 0.0
    %313 = vmatpush1.msra.mxu0 0.0
    %314 = vmatprep.subr.mxu0 0.0
    %315 = vmatpush1.msra.mxu0 0.0
    %316 = vmatprep.subr.mxu0 0.0
    %317 = vmatpush1.msra.mxu0 0.0
    %318 = vmatprep.subr.mxu0 0.0
    %319 = vmatpush1.msra.mxu0 0.0
    %320 = vmatprep.subr.mxu0 0.0
    %321 = vmatpush1.msra.mxu0 0.0
    %322 = vmatprep.subr.mxu0 0.0
    %323 = vmatpush1.msra.mxu0 0.0
    %324 = vmatprep.subr.mxu0 0.0
    %325 = vmatpush1.msra.mxu0 0.0
    %326 = vmatprep.subr.mxu0 0.0
    %327 = vmatpush1.msra.mxu0 0.0
    %328 = vmatprep.subr.mxu0 0.0
    %329 = vmatpush1.msra.mxu0 0.0
    %330 = vmatprep.subr.mxu0 0.0
    %331 = vmatpush1.msra.mxu0 0.0
    %332 = vmatprep.subr.mxu0 0.0
    %333 = vmatpush1.msra.mxu0 0.0
    %334 = vmatprep.subr.mxu0 0.0
    %335 = vmatpush1.msra.mxu0 0.0
    %336 = vmatprep.subr.mxu0 0.0
    %337 = vmatpush1.msra.mxu0 0.0
    %338 = vmatprep.subr.mxu0 0.0
    %339 = vmatpush1.msra.mxu0 0.0
    %340 = vmatprep.subr.mxu0 0.0
    %341 = vmatpush1.msra.mxu0 0.0
    %342 = vmatprep.mubr.f32.mxu0 0.0
    %343 = vmatmul.mubr.f32.gmra.mrb[0].mxu0 %v267
    %v344 = vpop.f32.mrb[0].mxu0
    %v345 = vadd.f32 0.0, %v344
    %v346 = vpop.f32.mrb[0].mxu0
    %347 = vmatprep.mubr.f32.mxu0 0.0
    %348 = vmatmul.mubr.f32.gmra.mrb[0].mxu0 %v270
    %v349 = vpop.f32.mrb[0].mxu0
    %v350 = vadd.f32 0.0, %v349
    %v351 = vpop.f32.mrb[0].mxu0
    %352 = vmatprep.mubr.f32.mxu0 0.0
    %353 = vmatmul.mubr.f32.gmra.mrb[0].mxu0 %v273
    %v354 = vpop.f32.mrb[0].mxu0
    %v355 = vadd.f32 0.0, %v354
    %v356 = vpop.f32.mrb[0].mxu0
    %357 = vmatprep.mubr.f32.mxu0 0.0
    %358 = vmatmul.mubr.f32.gmra.mrb[0].mxu0 %v276
    %v359 = vpop.f32.mrb[0].mxu0
    %v360 = vadd.f32 0.0, %v359
    %v361 = vpop.f32.mrb[0].mxu0
    %362 = vdwg.mxu0
    %v363 = vadd.f32 %v254, %v345
    %v364 = vadd.f32 %v255, %v350
    %v365 = vadd.f32 %v256, %v355
    %v366 = vadd.f32 %v257, %v360
    %v368 = vsel %vm43, 0.0, 0
    %370 = vmatprep.subr.mxu0 0.0
    %371 = vmatpush1.msra.mxu0 %v25
    %372 = vmatprep.subr.mxu0 0.0
    %373 = vmatpush1.msra.mxu0 %v26
    %374 = vmatprep.subr.mxu0 0.0
    %375 = vmatpush1.msra.mxu0 %v27
    %376 = vmatprep.subr.mxu0 0.0
    %377 = vmatpush1.msra.mxu0 %v28
    %378 = vmatprep.subr.mxu0 0.0
    %379 = vmatpush1.msra.mxu0 0.0
    %380 = vmatprep.subr.mxu0 0.0
    %381 = vmatpush1.msra.mxu0 0.0
    %382 = vmatprep.subr.mxu0 0.0
    %383 = vmatpush1.msra.mxu0 0.0
    %384 = vmatprep.subr.mxu0 0.0
    %385 = vmatpush1.msra.mxu0 0.0
    %386 = vmatprep.subr.mxu0 0.0
    %387 = vmatpush1.msra.mxu0 0.0
    %388 = vmatprep.subr.mxu0 0.0
    %389 = vmatpush1.msra.mxu0 0.0
    %390 = vmatprep.subr.mxu0 0.0
    %391 = vmatpush1.msra.mxu0 0.0
    %392 = vmatprep.subr.mxu0 0.0
    %393 = vmatpush1.msra.mxu0 0.0
    %394 = vmatprep.subr.mxu0 0.0
    %395 = vmatpush1.msra.mxu0 0.0
    %396 = vmatprep.subr.mxu0 0.0
    %397 = vmatpush1.msra.mxu0 0.0
    %398 = vmatprep.subr.mxu0 0.0
    %399 = vmatpush1.msra.mxu0 0.0
    %400 = vmatprep.subr.mxu0 0.0
    %401 = vmatpush1.msra.mxu0 0.0
    %402 = vmatprep.subr.mxu0 0.0
    %403 = vmatpush1.msra.mxu0 0.0
    %404 = vmatprep.subr.mxu0 0.0
    %405 = vmatpush1.msra.mxu0 0.0
    %406 = vmatprep.subr.mxu0 0.0
    %407 = vmatpush1.msra.mxu0 0.0
    %408 = vmatprep.subr.mxu0 0.0
    %409 = vmatpush1.msra.mxu0 0.0
    %410 = vmatprep.subr.mxu0 0.0
    %411 = vmatpush1.msra.mxu0 0.0
    %412 = vmatprep.subr.mxu0 0.0
    %413 = vmatpush1.msra.mxu0 0.0
    %414 = vmatprep.subr.mxu0 0.0
    %415 = vmatpush1.msra.mxu0 0.0
    %416 = vmatprep.subr.mxu0 0.0
    %417 = vmatpush1.msra.mxu0 0.0
    %418 = vmatprep.subr.mxu0 0.0
    %419 = vmatpush1.msra.mxu0 0.0
    %420 = vmatprep.subr.mxu0 0.0
    %421 = vmatpush1.msra.mxu0 0.0
    %422 = vmatprep.subr.mxu0 0.0
    %423 = vmatpush1.msra.mxu0 0.0
    %424 = vmatprep.subr.mxu0 0.0
    %425 = vmatpush1.msra.mxu0 0.0
    %426 = vmatprep.subr.mxu0 0.0
    %427 = vmatpush1.msra.mxu0 0.0
    %428 = vmatprep.subr.mxu0 0.0
    %429 = vmatpush1.msra.mxu0 0.0
    %430 = vmatprep.subr.mxu0 0.0
    %431 = vmatpush1.msra.mxu0 0.0
    %432 = vmatprep.subr.mxu0 0.0
    %433 = vmatpush1.msra.mxu0 0.0
    %434 = vmatprep.mubr.f32.mxu0 0.0
    %435 = vmatmul.mubr.f32.gmra.mrb[0].mxu0 %v368
    %v436 = vpop.f32.mrb[0].mxu0
    %v437 = vadd.f32 0.0, %v436
    %v438 = vpop.f32.mrb[0].mxu0
    %439 = vdwg.mxu0
    %v440 = vadd.f32 %v363, %v437
    %v441 = vxor.u32 %v440, 2147483648
    %v442 = vmul.f32 %v441, 1.442695
    %v443 = vpow.pop %v442
    %v444 = vadd.f32 %v443, 1.0
    %v445 = vrcp.pop %v444
    %v446 = vmul.f32 1.0, %v445
    %v447 = vtanh.pop %v440
    %v448 = vmul.f32 %v446, 0.0
    %450 = vrot.lane.b32.xlu0 %v447, 64
    %v451 = vpop.permute.xlu0 %450
    %v453 = vmul.f32 %v446, %v451
    %455 = vrot.lane.b32.xlu0 %v453, 32
    %v456 = vpop.permute.xlu0 %455
    %v458 = vadd.f32 %v448, %v456
    %v459 = vtanh.pop %v458
    %461 = vrot.lane.b32.xlu0 %v459, 64
    %v462 = vpop.permute.xlu0 %461
    %v464 = vmul.f32 %v446, %v462
    %466 = vrot.lane.b32.xlu0 %v464, 32
    %v467 = vpop.permute.xlu0 %466
    %vm469 = vcmask 253952
    %470 = vst.msk [vmem:[#allocation2] sm:$0x1] %vm469, %v467
    %vm471 = vcmask 254977
    %472 = vst.msk [vmem:[#allocation2 + $0xd] sm:$0x2] %vm471, %v467
    %v473 = vsel %vm43, %v467, 0
    %475 = vmatprep.subr.mxu0 0.0
    %476 = vmatpush1.msra.mxu0 %v25
    %477 = vmatprep.subr.mxu0 0.0
    %478 = vmatpush1.msra.mxu0 %v26
    %479 = vmatprep.subr.mxu0 0.0
    %480 = vmatpush1.msra.mxu0 %v27
    %481 = vmatprep.subr.mxu0 0.0
    %482 = vmatpush1.msra.mxu0 %v28
    %483 = vmatprep.subr.mxu0 0.0
    %484 = vmatpush1.msra.mxu0 0.0
    %485 = vmatprep.subr.mxu0 0.0
    %486 = vmatpush1.msra.mxu0 0.0
    %487 = vmatprep.subr.mxu0 0.0
    %488 = vmatpush1.msra.mxu0 0.0
    %489 = vmatprep.subr.mxu0 0.0
    %490 = vmatpush1.msra.mxu0 0.0
    %491 = vmatprep.subr.mxu0 0.0
    %492 = vmatpush1.msra.mxu0 0.0
    %493 = vmatprep.subr.mxu0 0.0
    %494 = vmatpush1.msra.mxu0 0.0
    %495 = vmatprep.subr.mxu0 0.0
    %496 = vmatpush1.msra.mxu0 0.0
    %497 = vmatprep.subr.mxu0 0.0
    %498 = vmatpush1.msra.mxu0 0.0
    %499 = vmatprep.subr.mxu0 0.0
    %500 = vmatpush1.msra.mxu0 0.0
    %501 = vmatprep.subr.mxu0 0.0
    %502 = vmatpush1.msra.mxu0 0.0
    %503 = vmatprep.subr.mxu0 0.0
    %504 = vmatpush1.msra.mxu0 0.0
    %505 = vmatprep.subr.mxu0 0.0
    %506 = vmatpush1.msra.mxu0 0.0
    %507 = vmatprep.subr.mxu0 0.0
    %508 = vmatpush1.msra.mxu0 0.0
    %509 = vmatprep.subr.mxu0 0.0
    %510 = vmatpush1.msra.mxu0 0.0
    %511 = vmatprep.subr.mxu0 0.0
    %512 = vmatpush1.msra.mxu0 0.0
    %513 = vmatprep.subr.mxu0 0.0
    %514 = vmatpush1.msra.mxu0 0.0
    %515 = vmatprep.subr.mxu0 0.0
    %516 = vmatpush1.msra.mxu0 0.0
    %517 = vmatprep.subr.mxu0 0.0
    %518 = vmatpush1.msra.mxu0 0.0
    %519 = vmatprep.subr.mxu0 0.0
    %520 = vmatpush1.msra.mxu0 0.0
    %521 = vmatprep.subr.mxu0 0.0
    %522 = vmatpush1.msra.mxu0 0.0
    %523 = vmatprep.subr.mxu0 0.0
    %524 = vmatpush1.msra.mxu0 0.0
    %525 = vmatprep.subr.mxu0 0.0
    %526 = vmatpush1.msra.mxu0 0.0
    %527 = vmatprep.subr.mxu0 0.0
    %528 = vmatpush1.msra.mxu0 0.0
    %529 = vmatprep.subr.mxu0 0.0
    %530 = vmatpush1.msra.mxu0 0.0
    %531 = vmatprep.subr.mxu0 0.0
    %532 = vmatpush1.msra.mxu0 0.0
    %533 = vmatprep.subr.mxu0 0.0
    %534 = vmatpush1.msra.mxu0 0.0
    %535 = vmatprep.subr.mxu0 0.0
    %536 = vmatpush1.msra.mxu0 0.0
    %537 = vmatprep.subr.mxu0 0.0
    %538 = vmatpush1.msra.mxu0 0.0
    %539 = vmatprep.mubr.f32.mxu0 0.0
    %540 = vmatmul.mubr.f32.gmra.mrb[0].mxu0 %v473
    %v541 = vpop.f32.mrb[0].mxu0
    %v542 = vadd.f32 0.0, %v541
    %v543 = vpop.f32.mrb[0].mxu0
    %544 = vdwg.mxu0
    %v546 = vrot.slane %v542, 6
    %v548 = vadd.f32 %v363, %v546
    %v549 = vxor.u32 %v548, 2147483648
    %v550 = vmul.f32 %v549, 1.442695
    %v551 = vpow.pop %v550
    %v552 = vadd.f32 %v551, 1.0
    %v553 = vrcp.pop %v552
    %v554 = vmul.f32 1.0, %v553
    %v555 = vtanh.pop %v548
    %v557 = vrot.slane %v458, 6
    %v559 = vmul.f32 %v554, %v557
    %561 = vrot.lane.b32.xlu0 %v555, 64
    %v562 = vpop.permute.xlu0 %561
    %v564 = vmul.f32 %v554, %v562
    %566 = vrot.lane.b32.xlu0 %v564, 32
    %v567 = vpop.permute.xlu0 %566
    %v569 = vadd.f32 %v559, %v567
    %v570 = vtanh.pop %v569
    %572 = vrot.lane.b32.xlu0 %v570, 64
    %v573 = vpop.permute.xlu0 %572
    %v575 = vmul.f32 %v554, %v573
    %577 = vrot.lane.b32.xlu0 %v575, 32
    %v578 = vpop.permute.xlu0 %577
    %vm580 = vcmask 256002
    %581 = vst.msk [vmem:[#allocation2 - $0x1] sm:$0x4] %vm580, %v578
    %vm582 = vcmask 257027
    %583 = vst.msk [vmem:[#allocation2 + $0xc] sm:$0x8] %vm582, %v578
    %v584 = vrot.slane %v575, 2
    %585 = vrot.lane.b32.xlu0 %v584, 32
    %v586 = vpop.permute.xlu0 %585
    %v587 = vsel %vm43, %v586, 0
    %589 = vmatprep.subr.mxu0 0.0
    %590 = vmatpush1.msra.mxu0 %v25
    %591 = vmatprep.subr.mxu0 0.0
    %592 = vmatpush1.msra.mxu0 %v26
    %593 = vmatprep.subr.mxu0 0.0
    %594 = vmatpush1.msra.mxu0 %v27
    %595 = vmatprep.subr.mxu0 0.0
    %596 = vmatpush1.msra.mxu0 %v28
    %597 = vmatprep.subr.mxu0 0.0
    %598 = vmatpush1.msra.mxu0 0.0
    %599 = vmatprep.subr.mxu0 0.0
    %600 = vmatpush1.msra.mxu0 0.0
    %601 = vmatprep.subr.mxu0 0.0
    %602 = vmatpush1.msra.mxu0 0.0
    %603 = vmatprep.subr.mxu0 0.0
    %604 = vmatpush1.msra.mxu0 0.0
    %605 = vmatprep.subr.mxu0 0.0
    %606 = vmatpush1.msra.mxu0 0.0
    %607 = vmatprep.subr.mxu0 0.0
    %608 = vmatpush1.msra.mxu0 0.0
    %609 = vmatprep.subr.mxu0 0.0
    %610 = vmatpush1.msra.mxu0 0.0
    %611 = vmatprep.subr.mxu0 0.0
    %612 = vmatpush1.msra.mxu0 0.0
    %613 = vmatprep.subr.mxu0 0.0
    %614 = vmatpush1.msra.mxu0 0.0
    %615 = vmatprep.subr.mxu0 0.0
    %616 = vmatpush1.msra.mxu0 0.0
    %617 = vmatprep.subr.mxu0 0.0
    %618 = vmatpush1.msra.mxu0 0.0
    %619 = vmatprep.subr.mxu0 0.0
    %620 = vmatpush1.msra.mxu0 0.0
    %621 = vmatprep.subr.mxu0 0.0
    %622 = vmatpush1.msra.mxu0 0.0
    %623 = vmatprep.subr.mxu0 0.0
    %624 = vmatpush1.msra.mxu0 0.0
    %625 = vmatprep.subr.mxu0 0.0
    %626 = vmatpush1.msra.mxu0 0.0
    %627 = vmatprep.subr.mxu0 0.0
    %628 = vmatpush1.msra.mxu0 0.0
    %629 = vmatprep.subr.mxu0 0.0
    %630 = vmatpush1.msra.mxu0 0.0
    %631 = vmatprep.subr.mxu0 0.0
    %632 = vmatpush1.msra.mxu0 0.0
    %633 = vmatprep.subr.mxu0 0.0
    %634 = vmatpush1.msra.mxu0 0.0
    %635 = vmatprep.subr.mxu0 0.0
    %636 = vmatpush1.msra.mxu0 0.0
    %637 = vmatprep.subr.mxu0 0.0
    %638 = vmatpush1.msra.mxu0 0.0
    %639 = vmatprep.subr.mxu0 0.0
    %640 = vmatpush1.msra.mxu0 0.0
    %641 = vmatprep.subr.mxu0 0.0
    %642 = vmatpush1.msra.mxu0 0.0
    %643 = vmatprep.subr.mxu0 0.0
    %644 = vmatpush1.msra.mxu0 0.0
    %645 = vmatprep.subr.mxu0 0.0
    %646 = vmatpush1.msra.mxu0 0.0
    %647 = vmatprep.subr.mxu0 0.0
    %648 = vmatpush1.msra.mxu0 0.0
    %649 = vmatprep.subr.mxu0 0.0
    %650 = vmatpush1.msra.mxu0 0.0
    %651 = vmatprep.subr.mxu0 0.0
    %652 = vmatpush1.msra.mxu0 0.0
    %653 = vmatprep.mubr.f32.mxu0 0.0
    %654 = vmatmul.mubr.f32.gmra.mrb[0].mxu0 %v587
    %v655 = vpop.f32.mrb[0].mxu0
    %v656 = vadd.f32 0.0, %v655
    %v657 = vpop.f32.mrb[0].mxu0
    %658 = vdwg.mxu0
    %v660 = vrot.slane %v656, 4
    %v662 = vadd.f32 %v363, %v660
    %v663 = vxor.u32 %v662, 2147483648
    %v664 = vmul.f32 %v663, 1.442695
    %v665 = vpow.pop %v664
    %v666 = vadd.f32 %v665, 1.0
    %v667 = vrcp.pop %v666
    %v668 = vmul.f32 1.0, %v667
    %v669 = vtanh.pop %v662
    %v671 = vrot.slane %v569, 6
    %v673 = vmul.f32 %v668, %v671
    %675 = vrot.lane.b32.xlu0 %v669, 64
    %v676 = vpop.permute.xlu0 %675
    %v678 = vmul.f32 %v668, %v676
    %680 = vrot.lane.b32.xlu0 %v678, 32
    %v681 = vpop.permute.xlu0 %680
    %v683 = vadd.f32 %v673, %v681
    %v684 = vtanh.pop %v683
    %686 = vrot.lane.b32.xlu0 %v684, 64
    %v687 = vpop.permute.xlu0 %686
    %v689 = vmul.f32 %v668, %v687
    %691 = vrot.lane.b32.xlu0 %v689, 32
    %v692 = vpop.permute.xlu0 %691
    %vm694 = vcmask 258052
    %695 = vst.msk [vmem:[#allocation2 - $0x2] sm:$0x10] %vm694, %v692
    %vm696 = vcmask 259077
    %697 = vst.msk [vmem:[#allocation2 + $0xb] sm:$0x20] %vm696, %v692
    %v698 = vrot.slane %v689, 4
    %699 = vrot.lane.b32.xlu0 %v698, 32
    %v700 = vpop.permute.xlu0 %699
    %v701 = vsel %vm43, %v700, 0
    %703 = vmatprep.subr.mxu0 0.0
    %704 = vmatpush1.msra.mxu0 %v25
    %705 = vmatprep.subr.mxu0 0.0
    %706 = vmatpush1.msra.mxu0 %v26
    %707 = vmatprep.subr.mxu0 0.0
    %708 = vmatpush1.msra.mxu0 %v27
    %709 = vmatprep.subr.mxu0 0.0
    %710 = vmatpush1.msra.mxu0 %v28
    %711 = vmatprep.subr.mxu0 0.0
    %712 = vmatpush1.msra.mxu0 0.0
    %713 = vmatprep.subr.mxu0 0.0
    %714 = vmatpush1.msra.mxu0 0.0
    %715 = vmatprep.subr.mxu0 0.0
    %716 = vmatpush1.msra.mxu0 0.0
    %717 = vmatprep.subr.mxu0 0.0
    %718 = vmatpush1.msra.mxu0 0.0
    %719 = vmatprep.subr.mxu0 0.0
    %720 = vmatpush1.msra.mxu0 0.0
    %721 = vmatprep.subr.mxu0 0.0
    %722 = vmatpush1.msra.mxu0 0.0
    %723 = vmatprep.subr.mxu0 0.0
    %724 = vmatpush1.msra.mxu0 0.0
    %725 = vmatprep.subr.mxu0 0.0
    %726 = vmatpush1.msra.mxu0 0.0
    %727 = vmatprep.subr.mxu0 0.0
    %728 = vmatpush1.msra.mxu0 0.0
    %729 = vmatprep.subr.mxu0 0.0
    %730 = vmatpush1.msra.mxu0 0.0
    %731 = vmatprep.subr.mxu0 0.0
    %732 = vmatpush1.msra.mxu0 0.0
    %733 = vmatprep.subr.mxu0 0.0
    %734 = vmatpush1.msra.mxu0 0.0
    %735 = vmatprep.subr.mxu0 0.0
    %736 = vmatpush1.msra.mxu0 0.0
    %737 = vmatprep.subr.mxu0 0.0
    %738 = vmatpush1.msra.mxu0 0.0
    %739 = vmatprep.subr.mxu0 0.0
    %740 = vmatpush1.msra.mxu0 0.0
    %741 = vmatprep.subr.mxu0 0.0
    %742 = vmatpush1.msra.mxu0 0.0
    %743 = vmatprep.subr.mxu0 0.0
    %744 = vmatpush1.msra.mxu0 0.0
    %745 = vmatprep.subr.mxu0 0.0
    %746 = vmatpush1.msra.mxu0 0.0
    %747 = vmatprep.subr.mxu0 0.0
    %748 = vmatpush1.msra.mxu0 0.0
    %749 = vmatprep.subr.mxu0 0.0
    %750 = vmatpush1.msra.mxu0 0.0
    %751 = vmatprep.subr.mxu0 0.0
    %752 = vmatpush1.msra.mxu0 0.0
    %753 = vmatprep.subr.mxu0 0.0
    %754 = vmatpush1.msra.mxu0 0.0
    %755 = vmatprep.subr.mxu0 0.0
    %756 = vmatpush1.msra.mxu0 0.0
    %757 = vmatprep.subr.mxu0 0.0
    %758 = vmatpush1.msra.mxu0 0.0
    %759 = vmatprep.subr.mxu0 0.0
    %760 = vmatpush1.msra.mxu0 0.0
    %761 = vmatprep.subr.mxu0 0.0
    %762 = vmatpush1.msra.mxu0 0.0
    %763 = vmatprep.subr.mxu0 0.0
    %764 = vmatpush1.msra.mxu0 0.0
    %765 = vmatprep.subr.mxu0 0.0
    %766 = vmatpush1.msra.mxu0 0.0
    %767 = vmatprep.mubr.f32.mxu0 0.0
    %768 = vmatmul.mubr.f32.gmra.mrb[0].mxu0 %v701
    %v769 = vpop.f32.mrb[0].mxu0
    %v770 = vadd.f32 0.0, %v769
    %v771 = vpop.f32.mrb[0].mxu0
    %772 = vdwg.mxu0
    %v774 = vrot.slane %v770, 2
    %v776 = vadd.f32 %v363, %v774
    %v777 = vxor.u32 %v776, 2147483648
    %v778 = vmul.f32 %v777, 1.442695
    %v779 = vpow.pop %v778
    %v780 = vadd.f32 %v779, 1.0
    %v781 = vrcp.pop %v780
    %v782 = vmul.f32 1.0, %v781
    %v783 = vtanh.pop %v776
    %v785 = vrot.slane %v683, 6
    %v787 = vmul.f32 %v782, %v785
    %789 = vrot.lane.b32.xlu0 %v783, 64
    %v790 = vpop.permute.xlu0 %789
    %v792 = vmul.f32 %v782, %v790
    %794 = vrot.lane.b32.xlu0 %v792, 32
    %v795 = vpop.permute.xlu0 %794
    %v797 = vadd.f32 %v787, %v795
    %v798 = vtanh.pop %v797
    %800 = vrot.lane.b32.xlu0 %v798, 64
    %v801 = vpop.permute.xlu0 %800
    %v803 = vmul.f32 %v782, %v801
    %805 = vrot.lane.b32.xlu0 %v803, 32
    %v806 = vpop.permute.xlu0 %805
    %vm808 = vcmask 260102
    %809 = vst.msk [vmem:[#allocation2 - $0x3] sm:$0x40] %vm808, %v806
    %vm810 = vcmask 261127
    %811 = vst.msk [vmem:[#allocation2 + $0xa] sm:$0x80] %vm810, %v806
    %v812 = vrot.slane %v803, 6
    %813 = vrot.lane.b32.xlu0 %v812, 32
    %v814 = vpop.permute.xlu0 %813
    %v815 = vsel %vm43, %v814, 0
    %817 = vmatprep.subr.mxu0 0.0
    %818 = vmatpush1.msra.mxu0 %v25
    %819 = vmatprep.subr.mxu0 0.0
    %820 = vmatpush1.msra.mxu0 %v26
    %821 = vmatprep.subr.mxu0 0.0
    %822 = vmatpush1.msra.mxu0 %v27
    %823 = vmatprep.subr.mxu0 0.0
    %824 = vmatpush1.msra.mxu0 %v28
    %825 = vmatprep.subr.mxu0 0.0
    %826 = vmatpush1.msra.mxu0 0.0
    %827 = vmatprep.subr.mxu0 0.0
    %828 = vmatpush1.msra.mxu0 0.0
    %829 = vmatprep.subr.mxu0 0.0
    %830 = vmatpush1.msra.mxu0 0.0
    %831 = vmatprep.subr.mxu0 0.0
    %832 = vmatpush1.msra.mxu0 0.0
    %833 = vmatprep.subr.mxu0 0.0
    %834 = vmatpush1.msra.mxu0 0.0
    %835 = vmatprep.subr.mxu0 0.0
    %836 = vmatpush1.msra.mxu0 0.0
    %837 = vmatprep.subr.mxu0 0.0
    %838 = vmatpush1.msra.mxu0 0.0
    %839 = vmatprep.subr.mxu0 0.0
    %840 = vmatpush1.msra.mxu0 0.0
    %841 = vmatprep.subr.mxu0 0.0
    %842 = vmatpush1.msra.mxu0 0.0
    %843 = vmatprep.subr.mxu0 0.0
    %844 = vmatpush1.msra.mxu0 0.0
    %845 = vmatprep.subr.mxu0 0.0
    %846 = vmatpush1.msra.mxu0 0.0
    %847 = vmatprep.subr.mxu0 0.0
    %848 = vmatpush1.msra.mxu0 0.0
    %849 = vmatprep.subr.mxu0 0.0
    %850 = vmatpush1.msra.mxu0 0.0
    %851 = vmatprep.subr.mxu0 0.0
    %852 = vmatpush1.msra.mxu0 0.0
    %853 = vmatprep.subr.mxu0 0.0
    %854 = vmatpush1.msra.mxu0 0.0
    %855 = vmatprep.subr.mxu0 0.0
    %856 = vmatpush1.msra.mxu0 0.0
    %857 = vmatprep.subr.mxu0 0.0
    %858 = vmatpush1.msra.mxu0 0.0
    %859 = vmatprep.subr.mxu0 0.0
    %860 = vmatpush1.msra.mxu0 0.0
    %861 = vmatprep.subr.mxu0 0.0
    %862 = vmatpush1.msra.mxu0 0.0
    %863 = vmatprep.subr.mxu0 0.0
    %864 = vmatpush1.msra.mxu0 0.0
    %865 = vmatprep.subr.mxu0 0.0
    %866 = vmatpush1.msra.mxu0 0.0
    %867 = vmatprep.subr.mxu0 0.0
    %868 = vmatpush1.msra.mxu0 0.0
    %869 = vmatprep.subr.mxu0 0.0
    %870 = vmatpush1.msra.mxu0 0.0
    %871 = vmatprep.subr.mxu0 0.0
    %872 = vmatpush1.msra.mxu0 0.0
    %873 = vmatprep.subr.mxu0 0.0
    %874 = vmatpush1.msra.mxu0 0.0
    %875 = vmatprep.subr.mxu0 0.0
    %876 = vmatpush1.msra.mxu0 0.0
    %877 = vmatprep.subr.mxu0 0.0
    %878 = vmatpush1.msra.mxu0 0.0
    %879 = vmatprep.subr.mxu0 0.0
    %880 = vmatpush1.msra.mxu0 0.0
    %881 = vmatprep.mubr.f32.mxu0 0.0
    %882 = vmatmul.mubr.f32.gmra.mrb[0].mxu0 %v815
    %v883 = vpop.f32.mrb[0].mxu0
    %v884 = vadd.f32 0.0, %v883
    %v885 = vpop.f32.mrb[0].mxu0
    %886 = vdwg.mxu0
    %v887 = vadd.f32 %v364, %v884
    %v888 = vxor.u32 %v887, 2147483648
    %v889 = vmul.f32 %v888, 1.442695
    %v890 = vpow.pop %v889
    %v891 = vadd.f32 %v890, 1.0
    %v892 = vrcp.pop %v891
    %v893 = vmul.f32 1.0, %v892
    %v894 = vtanh.pop %v887
    %v896 = vrot.slane %v797, 6
    %v898 = vmul.f32 %v893, %v896
    %900 = vrot.lane.b32.xlu0 %v894, 64
    %v901 = vpop.permute.xlu0 %900
    %v903 = vmul.f32 %v893, %v901
    %905 = vrot.lane.b32.xlu0 %v903, 32
    %v906 = vpop.permute.xlu0 %905
    %v908 = vadd.f32 %v898, %v906
    %v909 = vtanh.pop %v908
    %911 = vrot.lane.b32.xlu0 %v909, 64
    %v912 = vpop.permute.xlu0 %911
    %v914 = vmul.f32 %v893, %v912
    %916 = vrot.lane.b32.xlu0 %v914, 32
    %v917 = vpop.permute.xlu0 %916
    %919 = vst.msk [vmem:[#allocation2 + $0x4] sm:$0x1] %vm469, %v917
    %920 = vst.msk [vmem:[#allocation2 + $0x11] sm:$0x2] %vm471, %v917
    %v921 = vsel %vm43, %v917, 0
    %923 = vmatprep.subr.mxu0 0.0
    %924 = vmatpush1.msra.mxu0 %v25
    %925 = vmatprep.subr.mxu0 0.0
    %926 = vmatpush1.msra.mxu0 %v26
    %927 = vmatprep.subr.mxu0 0.0
    %928 = vmatpush1.msra.mxu0 %v27
    %929 = vmatprep.subr.mxu0 0.0
    %930 = vmatpush1.msra.mxu0 %v28
    %931 = vmatprep.subr.mxu0 0.0
    %932 = vmatpush1.msra.mxu0 0.0
    %933 = vmatprep.subr.mxu0 0.0
    %934 = vmatpush1.msra.mxu0 0.0
    %935 = vmatprep.subr.mxu0 0.0
    %936 = vmatpush1.msra.mxu0 0.0
    %937 = vmatprep.subr.mxu0 0.0
    %938 = vmatpush1.msra.mxu0 0.0
    %939 = vmatprep.subr.mxu0 0.0
    %940 = vmatpush1.msra.mxu0 0.0
    %941 = vmatprep.subr.mxu0 0.0
    %942 = vmatpush1.msra.mxu0 0.0
    %943 = vmatprep.subr.mxu0 0.0
    %944 = vmatpush1.msra.mxu0 0.0
    %945 = vmatprep.subr.mxu0 0.0
    %946 = vmatpush1.msra.mxu0 0.0
    %947 = vmatprep.subr.mxu0 0.0
    %948 = vmatpush1.msra.mxu0 0.0
    %949 = vmatprep.subr.mxu0 0.0
    %950 = vmatpush1.msra.mxu0 0.0
    %951 = vmatprep.subr.mxu0 0.0
    %952 = vmatpush1.msra.mxu0 0.0
    %953 = vmatprep.subr.mxu0 0.0
    %954 = vmatpush1.msra.mxu0 0.0
    %955 = vmatprep.subr.mxu0 0.0
    %956 = vmatpush1.msra.mxu0 0.0
    %957 = vmatprep.subr.mxu0 0.0
    %958 = vmatpush1.msra.mxu0 0.0
    %959 = vmatprep.subr.mxu0 0.0
    %960 = vmatpush1.msra.mxu0 0.0
    %961 = vmatprep.subr.mxu0 0.0
    %962 = vmatpush1.msra.mxu0 0.0
    %963 = vmatprep.subr.mxu0 0.0
    %964 = vmatpush1.msra.mxu0 0.0
    %965 = vmatprep.subr.mxu0 0.0
    %966 = vmatpush1.msra.mxu0 0.0
    %967 = vmatprep.subr.mxu0 0.0
    %968 = vmatpush1.msra.mxu0 0.0
    %969 = vmatprep.subr.mxu0 0.0
    %970 = vmatpush1.msra.mxu0 0.0
    %971 = vmatprep.subr.mxu0 0.0
    %972 = vmatpush1.msra.mxu0 0.0
    %973 = vmatprep.subr.mxu0 0.0
    %974 = vmatpush1.msra.mxu0 0.0
    %975 = vmatprep.subr.mxu0 0.0
    %976 = vmatpush1.msra.mxu0 0.0
    %977 = vmatprep.subr.mxu0 0.0
    %978 = vmatpush1.msra.mxu0 0.0
    %979 = vmatprep.subr.mxu0 0.0
    %980 = vmatpush1.msra.mxu0 0.0
    %981 = vmatprep.subr.mxu0 0.0
    %982 = vmatpush1.msra.mxu0 0.0
    %983 = vmatprep.subr.mxu0 0.0
    %984 = vmatpush1.msra.mxu0 0.0
    %985 = vmatprep.subr.mxu0 0.0
    %986 = vmatpush1.msra.mxu0 0.0
    %987 = vmatprep.mubr.f32.mxu0 0.0
    %988 = vmatmul.mubr.f32.gmra.mrb[0].mxu0 %v921
    %v989 = vpop.f32.mrb[0].mxu0
    %v990 = vadd.f32 0.0, %v989
    %v991 = vpop.f32.mrb[0].mxu0
    %992 = vdwg.mxu0
    %v994 = vrot.slane %v990, 6
    %v996 = vadd.f32 %v364, %v994
    %v997 = vxor.u32 %v996, 2147483648
    %v998 = vmul.f32 %v997, 1.442695
    %v999 = vpow.pop %v998
    %v1000 = vadd.f32 %v999, 1.0
    %v1001 = vrcp.pop %v1000
    %v1002 = vmul.f32 1.0, %v1001
    %v1003 = vtanh.pop %v996
    %v1005 = vrot.slane %v908, 6
    %v1007 = vmul.f32 %v1002, %v1005
    %1009 = vrot.lane.b32.xlu0 %v1003, 64
    %v1010 = vpop.permute.xlu0 %1009
    %v1012 = vmul.f32 %v1002, %v1010
    %1014 = vrot.lane.b32.xlu0 %v1012, 32
    %v1015 = vpop.permute.xlu0 %1014
    %v1017 = vadd.f32 %v1007, %v1015
    %v1018 = vtanh.pop %v1017
    %1020 = vrot.lane.b32.xlu0 %v1018, 64
    %v1021 = vpop.permute.xlu0 %1020
    %v1023 = vmul.f32 %v1002, %v1021
    %1025 = vrot.lane.b32.xlu0 %v1023, 32
    %v1026 = vpop.permute.xlu0 %1025
    %1028 = vst.msk [vmem:[#allocation2 + $0x3] sm:$0x4] %vm580, %v1026
    %1029 = vst.msk [vmem:[#allocation2 + $0x10] sm:$0x8] %vm582, %v1026
    %v1030 = vrot.slane %v1023, 2
    %1031 = vrot.lane.b32.xlu0 %v1030, 32
    %v1032 = vpop.permute.xlu0 %1031
    %v1033 = vsel %vm43, %v1032, 0
    %1035 = vmatprep.subr.mxu0 0.0
    %1036 = vmatpush1.msra.mxu0 %v25
    %1037 = vmatprep.subr.mxu0 0.0
    %1038 = vmatpush1.msra.mxu0 %v26
    %1039 = vmatprep.subr.mxu0 0.0
    %1040 = vmatpush1.msra.mxu0 %v27
    %1041 = vmatprep.subr.mxu0 0.0
    %1042 = vmatpush1.msra.mxu0 %v28
    %1043 = vmatprep.subr.mxu0 0.0
    %1044 = vmatpush1.msra.mxu0 0.0
    %1045 = vmatprep.subr.mxu0 0.0
    %1046 = vmatpush1.msra.mxu0 0.0
    %1047 = vmatprep.subr.mxu0 0.0
    %1048 = vmatpush1.msra.mxu0 0.0
    %1049 = vmatprep.subr.mxu0 0.0
    %1050 = vmatpush1.msra.mxu0 0.0
    %1051 = vmatprep.subr.mxu0 0.0
    %1052 = vmatpush1.msra.mxu0 0.0
    %1053 = vmatprep.subr.mxu0 0.0
    %1054 = vmatpush1.msra.mxu0 0.0
    %1055 = vmatprep.subr.mxu0 0.0
    %1056 = vmatpush1.msra.mxu0 0.0
    %1057 = vmatprep.subr.mxu0 0.0
    %1058 = vmatpush1.msra.mxu0 0.0
    %1059 = vmatprep.subr.mxu0 0.0
    %1060 = vmatpush1.msra.mxu0 0.0
    %1061 = vmatprep.subr.mxu0 0.0
    %1062 = vmatpush1.msra.mxu0 0.0
    %1063 = vmatprep.subr.mxu0 0.0
    %1064 = vmatpush1.msra.mxu0 0.0
    %1065 = vmatprep.subr.mxu0 0.0
    %1066 = vmatpush1.msra.mxu0 0.0
    %1067 = vmatprep.subr.mxu0 0.0
    %1068 = vmatpush1.msra.mxu0 0.0
    %1069 = vmatprep.subr.mxu0 0.0
    %1070 = vmatpush1.msra.mxu0 0.0
    %1071 = vmatprep.subr.mxu0 0.0
    %1072 = vmatpush1.msra.mxu0 0.0
    %1073 = vmatprep.subr.mxu0 0.0
    %1074 = vmatpush1.msra.mxu0 0.0
    %1075 = vmatprep.subr.mxu0 0.0
    %1076 = vmatpush1.msra.mxu0 0.0
    %1077 = vmatprep.subr.mxu0 0.0
    %1078 = vmatpush1.msra.mxu0 0.0
    %1079 = vmatprep.subr.mxu0 0.0
    %1080 = vmatpush1.msra.mxu0 0.0
    %1081 = vmatprep.subr.mxu0 0.0
    %1082 = vmatpush1.msra.mxu0 0.0
    %1083 = vmatprep.subr.mxu0 0.0
    %1084 = vmatpush1.msra.mxu0 0.0
    %1085 = vmatprep.subr.mxu0 0.0
    %1086 = vmatpush1.msra.mxu0 0.0
    %1087 = vmatprep.subr.mxu0 0.0
    %1088 = vmatpush1.msra.mxu0 0.0
    %1089 = vmatprep.subr.mxu0 0.0
    %1090 = vmatpush1.msra.mxu0 0.0
    %1091 = vmatprep.subr.mxu0 0.0
    %1092 = vmatpush1.msra.mxu0 0.0
    %1093 = vmatprep.subr.mxu0 0.0
    %1094 = vmatpush1.msra.mxu0 0.0
    %1095 = vmatprep.subr.mxu0 0.0
    %1096 = vmatpush1.msra.mxu0 0.0
    %1097 = vmatprep.subr.mxu0 0.0
    %1098 = vmatpush1.msra.mxu0 0.0
    %1099 = vmatprep.mubr.f32.mxu0 0.0
    %1100 = vmatmul.mubr.f32.gmra.mrb[0].mxu0 %v1033
    %v1101 = vpop.f32.mrb[0].mxu0
    %v1102 = vadd.f32 0.0, %v1101
    %v1103 = vpop.f32.mrb[0].mxu0
    %1104 = vdwg.mxu0
    %v1106 = vrot.slane %v1102, 4
    %v1108 = vadd.f32 %v364, %v1106
    %v1109 = vxor.u32 %v1108, 2147483648
    %v1110 = vmul.f32 %v1109, 1.442695
    %v1111 = vpow.pop %v1110
    %v1112 = vadd.f32 %v1111, 1.0
    %v1113 = vrcp.pop %v1112
    %v1114 = vmul.f32 1.0, %v1113
    %v1115 = vtanh.pop %v1108
    %v1117 = vrot.slane %v1017, 6
    %v1119 = vmul.f32 %v1114, %v1117
    %1121 = vrot.lane.b32.xlu0 %v1115, 64
    %v1122 = vpop.permute.xlu0 %1121
    %v1124 = vmul.f32 %v1114, %v1122
    %1126 = vrot.lane.b32.xlu0 %v1124, 32
    %v1127 = vpop.permute.xlu0 %1126
    %v1129 = vadd.f32 %v1119, %v1127
    %v1130 = vtanh.pop %v1129
    %1132 = vrot.lane.b32.xlu0 %v1130, 64
    %v1133 = vpop.permute.xlu0 %1132
    %v1135 = vmul.f32 %v1114, %v1133
    %1137 = vrot.lane.b32.xlu0 %v1135, 32
    %v1138 = vpop.permute.xlu0 %1137
    %1140 = vst.msk [vmem:[#allocation2 + $0x2] sm:$0x10] %vm694, %v1138
    %1141 = vst.msk [vmem:[#allocation2 + $0xf] sm:$0x20] %vm696, %v1138
    %v1142 = vrot.slane %v1135, 4
    %1143 = vrot.lane.b32.xlu0 %v1142, 32
    %v1144 = vpop.permute.xlu0 %1143
    %v1145 = vsel %vm43, %v1144, 0
    %1147 = vmatprep.subr.mxu0 0.0
    %1148 = vmatpush1.msra.mxu0 %v25
    %1149 = vmatprep.subr.mxu0 0.0
    %1150 = vmatpush1.msra.mxu0 %v26
    %1151 = vmatprep.subr.mxu0 0.0
    %1152 = vmatpush1.msra.mxu0 %v27
    %1153 = vmatprep.subr.mxu0 0.0
    %1154 = vmatpush1.msra.mxu0 %v28
    %1155 = vmatprep.subr.mxu0 0.0
    %1156 = vmatpush1.msra.mxu0 0.0
    %1157 = vmatprep.subr.mxu0 0.0
    %1158 = vmatpush1.msra.mxu0 0.0
    %1159 = vmatprep.subr.mxu0 0.0
    %1160 = vmatpush1.msra.mxu0 0.0
    %1161 = vmatprep.subr.mxu0 0.0
    %1162 = vmatpush1.msra.mxu0 0.0
    %1163 = vmatprep.subr.mxu0 0.0
    %1164 = vmatpush1.msra.mxu0 0.0
    %1165 = vmatprep.subr.mxu0 0.0
    %1166 = vmatpush1.msra.mxu0 0.0
    %1167 = vmatprep.subr.mxu0 0.0
    %1168 = vmatpush1.msra.mxu0 0.0
    %1169 = vmatprep.subr.mxu0 0.0
    %1170 = vmatpush1.msra.mxu0 0.0
    %1171 = vmatprep.subr.mxu0 0.0
    %1172 = vmatpush1.msra.mxu0 0.0
    %1173 = vmatprep.subr.mxu0 0.0
    %1174 = vmatpush1.msra.mxu0 0.0
    %1175 = vmatprep.subr.mxu0 0.0
    %1176 = vmatpush1.msra.mxu0 0.0
    %1177 = vmatprep.subr.mxu0 0.0
    %1178 = vmatpush1.msra.mxu0 0.0
    %1179 = vmatprep.subr.mxu0 0.0
    %1180 = vmatpush1.msra.mxu0 0.0
    %1181 = vmatprep.subr.mxu0 0.0
    %1182 = vmatpush1.msra.mxu0 0.0
    %1183 = vmatprep.subr.mxu0 0.0
    %1184 = vmatpush1.msra.mxu0 0.0
    %1185 = vmatprep.subr.mxu0 0.0
    %1186 = vmatpush1.msra.mxu0 0.0
    %1187 = vmatprep.subr.mxu0 0.0
    %1188 = vmatpush1.msra.mxu0 0.0
    %1189 = vmatprep.subr.mxu0 0.0
    %1190 = vmatpush1.msra.mxu0 0.0
    %1191 = vmatprep.subr.mxu0 0.0
    %1192 = vmatpush1.msra.mxu0 0.0
    %1193 = vmatprep.subr.mxu0 0.0
    %1194 = vmatpush1.msra.mxu0 0.0
    %1195 = vmatprep.subr.mxu0 0.0
    %1196 = vmatpush1.msra.mxu0 0.0
    %1197 = vmatprep.subr.mxu0 0.0
    %1198 = vmatpush1.msra.mxu0 0.0
    %1199 = vmatprep.subr.mxu0 0.0
    %1200 = vmatpush1.msra.mxu0 0.0
    %1201 = vmatprep.subr.mxu0 0.0
    %1202 = vmatpush1.msra.mxu0 0.0
    %1203 = vmatprep.subr.mxu0 0.0
    %1204 = vmatpush1.msra.mxu0 0.0
    %1205 = vmatprep.subr.mxu0 0.0
    %1206 = vmatpush1.msra.mxu0 0.0
    %1207 = vmatprep.subr.mxu0 0.0
    %1208 = vmatpush1.msra.mxu0 0.0
    %1209 = vmatprep.subr.mxu0 0.0
    %1210 = vmatpush1.msra.mxu0 0.0
    %1211 = vmatprep.mubr.f32.mxu0 0.0
    %1212 = vmatmul.mubr.f32.gmra.mrb[0].mxu0 %v1145
    %v1213 = vpop.f32.mrb[0].mxu0
    %v1214 = vadd.f32 0.0, %v1213
    %v1215 = vpop.f32.mrb[0].mxu0
    %1216 = vdwg.mxu0
    %v1218 = vrot.slane %v1214, 2
    %v1220 = vadd.f32 %v364, %v1218
    %v1221 = vxor.u32 %v1220, 2147483648
    %v1222 = vmul.f32 %v1221, 1.442695
    %v1223 = vpow.pop %v1222
    %v1224 = vadd.f32 %v1223, 1.0
    %v1225 = vrcp.pop %v1224
    %v1226 = vmul.f32 1.0, %v1225
    %v1227 = vtanh.pop %v1220
    %v1229 = vrot.slane %v1129, 6
    %v1231 = vmul.f32 %v1226, %v1229
    %1233 = vrot.lane.b32.xlu0 %v1227, 64
    %v1234 = vpop.permute.xlu0 %1233
    %v1236 = vmul.f32 %v1226, %v1234
    %1238 = vrot.lane.b32.xlu0 %v1236, 32
    %v1239 = vpop.permute.xlu0 %1238
    %v1241 = vadd.f32 %v1231, %v1239
    %v1242 = vtanh.pop %v1241
    %1244 = vrot.lane.b32.xlu0 %v1242, 64
    %v1245 = vpop.permute.xlu0 %1244
    %v1247 = vmul.f32 %v1226, %v1245
    %1249 = vrot.lane.b32.xlu0 %v1247, 32
    %v1250 = vpop.permute.xlu0 %1249
    %1252 = vst.msk [vmem:[#allocation2 + $0x1] sm:$0x40] %vm808, %v1250
    %1253 = vst.msk [vmem:[#allocation2 + $0xe] sm:$0x80] %vm810, %v1250
    %v1254 = vrot.slane %v1247, 6
    %1255 = vrot.lane.b32.xlu0 %v1254, 32
    %v1256 = vpop.permute.xlu0 %1255
    %v1257 = vsel %vm43, %v1256, 0
    %1259 = vmatprep.subr.mxu0 0.0
    %1260 = vmatpush1.msra.mxu0 %v25
    %1261 = vmatprep.subr.mxu0 0.0
    %1262 = vmatpush1.msra.mxu0 %v26
    %1263 = vmatprep.subr.mxu0 0.0
    %1264 = vmatpush1.msra.mxu0 %v27
    %1265 = vmatprep.subr.mxu0 0.0
    %1266 = vmatpush1.msra.mxu0 %v28
    %1267 = vmatprep.subr.mxu0 0.0
    %1268 = vmatpush1.msra.mxu0 0.0
    %1269 = vmatprep.subr.mxu0 0.0
    %1270 = vmatpush1.msra.mxu0 0.0
    %1271 = vmatprep.subr.mxu0 0.0
    %1272 = vmatpush1.msra.mxu0 0.0
    %1273 = vmatprep.subr.mxu0 0.0
    %1274 = vmatpush1.msra.mxu0 0.0
    %1275 = vmatprep.subr.mxu0 0.0
    %1276 = vmatpush1.msra.mxu0 0.0
    %1277 = vmatprep.subr.mxu0 0.0
    %1278 = vmatpush1.msra.mxu0 0.0
    %1279 = vmatprep.subr.mxu0 0.0
    %1280 = vmatpush1.msra.mxu0 0.0
    %1281 = vmatprep.subr.mxu0 0.0
    %1282 = vmatpush1.msra.mxu0 0.0
    %1283 = vmatprep.subr.mxu0 0.0
    %1284 = vmatpush1.msra.mxu0 0.0
    %1285 = vmatprep.subr.mxu0 0.0
    %1286 = vmatpush1.msra.mxu0 0.0
    %1287 = vmatprep.subr.mxu0 0.0
    %1288 = vmatpush1.msra.mxu0 0.0
    %1289 = vmatprep.subr.mxu0 0.0
    %1290 = vmatpush1.msra.mxu0 0.0
    %1291 = vmatprep.subr.mxu0 0.0
    %1292 = vmatpush1.msra.mxu0 0.0
    %1293 = vmatprep.subr.mxu0 0.0
    %1294 = vmatpush1.msra.mxu0 0.0
    %1295 = vmatprep.subr.mxu0 0.0
    %1296 = vmatpush1.msra.mxu0 0.0
    %1297 = vmatprep.subr.mxu0 0.0
    %1298 = vmatpush1.msra.mxu0 0.0
    %1299 = vmatprep.subr.mxu0 0.0
    %1300 = vmatpush1.msra.mxu0 0.0
    %1301 = vmatprep.subr.mxu0 0.0
    %1302 = vmatpush1.msra.mxu0 0.0
    %1303 = vmatprep.subr.mxu0 0.0
    %1304 = vmatpush1.msra.mxu0 0.0
    %1305 = vmatprep.subr.mxu0 0.0
    %1306 = vmatpush1.msra.mxu0 0.0
    %1307 = vmatprep.subr.mxu0 0.0
    %1308 = vmatpush1.msra.mxu0 0.0
    %1309 = vmatprep.subr.mxu0 0.0
    %1310 = vmatpush1.msra.mxu0 0.0
    %1311 = vmatprep.subr.mxu0 0.0
    %1312 = vmatpush1.msra.mxu0 0.0
    %1313 = vmatprep.subr.mxu0 0.0
    %1314 = vmatpush1.msra.mxu0 0.0
    %1315 = vmatprep.subr.mxu0 0.0
    %1316 = vmatpush1.msra.mxu0 0.0
    %1317 = vmatprep.subr.mxu0 0.0
    %1318 = vmatpush1.msra.mxu0 0.0
    %1319 = vmatprep.subr.mxu0 0.0
    %1320 = vmatpush1.msra.mxu0 0.0
    %1321 = vmatprep.subr.mxu0 0.0
    %1322 = vmatpush1.msra.mxu0 0.0
    %1323 = vmatprep.mubr.f32.mxu0 0.0
    %1324 = vmatmul.mubr.f32.gmra.mrb[0].mxu0 %v1257
    %v1325 = vpop.f32.mrb[0].mxu0
    %v1326 = vadd.f32 0.0, %v1325
    %v1327 = vpop.f32.mrb[0].mxu0
    %1328 = vdwg.mxu0
    %v1329 = vadd.f32 %v365, %v1326
    %v1330 = vxor.u32 %v1329, 2147483648
    %v1331 = vmul.f32 %v1330, 1.442695
    %v1332 = vpow.pop %v1331
    %v1333 = vadd.f32 %v1332, 1.0
    %v1334 = vrcp.pop %v1333
    %v1335 = vmul.f32 1.0, %v1334
    %v1336 = vtanh.pop %v1329
    %v1338 = vrot.slane %v1241, 6
    %v1340 = vmul.f32 %v1335, %v1338
    %1342 = vrot.lane.b32.xlu0 %v1336, 64
    %v1343 = vpop.permute.xlu0 %1342
    %v1345 = vmul.f32 %v1335, %v1343
    %1347 = vrot.lane.b32.xlu0 %v1345, 32
    %v1348 = vpop.permute.xlu0 %1347
    %v1350 = vadd.f32 %v1340, %v1348
    %v1351 = vtanh.pop %v1350
    %1353 = vrot.lane.b32.xlu0 %v1351, 64
    %v1354 = vpop.permute.xlu0 %1353
    %v1356 = vmul.f32 %v1335, %v1354
    %1358 = vrot.lane.b32.xlu0 %v1356, 32
    %v1359 = vpop.permute.xlu0 %1358
    %1361 = vst.msk [vmem:[#allocation2 + $0x8] sm:$0x1] %vm469, %v1359
    %1362 = vst.msk [vmem:[#allocation2 + $0x15] sm:$0x2] %vm471, %v1359
    %v1363 = vsel %vm43, %v1359, 0
    %1365 = vmatprep.subr.mxu0 0.0
    %1366 = vmatpush1.msra.mxu0 %v25
    %1367 = vmatprep.subr.mxu0 0.0
    %1368 = vmatpush1.msra.mxu0 %v26
    %1369 = vmatprep.subr.mxu0 0.0
    %1370 = vmatpush1.msra.mxu0 %v27
    %1371 = vmatprep.subr.mxu0 0.0
    %1372 = vmatpush1.msra.mxu0 %v28
    %1373 = vmatprep.subr.mxu0 0.0
    %1374 = vmatpush1.msra.mxu0 0.0
    %1375 = vmatprep.subr.mxu0 0.0
    %1376 = vmatpush1.msra.mxu0 0.0
    %1377 = vmatprep.subr.mxu0 0.0
    %1378 = vmatpush1.msra.mxu0 0.0
    %1379 = vmatprep.subr.mxu0 0.0
    %1380 = vmatpush1.msra.mxu0 0.0
    %1381 = vmatprep.subr.mxu0 0.0
    %1382 = vmatpush1.msra.mxu0 0.0
    %1383 = vmatprep.subr.mxu0 0.0
    %1384 = vmatpush1.msra.mxu0 0.0
    %1385 = vmatprep.subr.mxu0 0.0
    %1386 = vmatpush1.msra.mxu0 0.0
    %1387 = vmatprep.subr.mxu0 0.0
    %1388 = vmatpush1.msra.mxu0 0.0
    %1389 = vmatprep.subr.mxu0 0.0
    %1390 = vmatpush1.msra.mxu0 0.0
    %1391 = vmatprep.subr.mxu0 0.0
    %1392 = vmatpush1.msra.mxu0 0.0
    %1393 = vmatprep.subr.mxu0 0.0
    %1394 = vmatpush1.msra.mxu0 0.0
    %1395 = vmatprep.subr.mxu0 0.0
    %1396 = vmatpush1.msra.mxu0 0.0
    %1397 = vmatprep.subr.mxu0 0.0
    %1398 = vmatpush1.msra.mxu0 0.0
    %1399 = vmatprep.subr.mxu0 0.0
    %1400 = vmatpush1.msra.mxu0 0.0
    %1401 = vmatprep.subr.mxu0 0.0
    %1402 = vmatpush1.msra.mxu0 0.0
    %1403 = vmatprep.subr.mxu0 0.0
    %1404 = vmatpush1.msra.mxu0 0.0
    %1405 = vmatprep.subr.mxu0 0.0
    %1406 = vmatpush1.msra.mxu0 0.0
    %1407 = vmatprep.subr.mxu0 0.0
    %1408 = vmatpush1.msra.mxu0 0.0
    %1409 = vmatprep.subr.mxu0 0.0
    %1410 = vmatpush1.msra.mxu0 0.0
    %1411 = vmatprep.subr.mxu0 0.0
    %1412 = vmatpush1.msra.mxu0 0.0
    %1413 = vmatprep.subr.mxu0 0.0
    %1414 = vmatpush1.msra.mxu0 0.0
    %1415 = vmatprep.subr.mxu0 0.0
    %1416 = vmatpush1.msra.mxu0 0.0
    %1417 = vmatprep.subr.mxu0 0.0
    %1418 = vmatpush1.msra.mxu0 0.0
    %1419 = vmatprep.subr.mxu0 0.0
    %1420 = vmatpush1.msra.mxu0 0.0
    %1421 = vmatprep.subr.mxu0 0.0
    %1422 = vmatpush1.msra.mxu0 0.0
    %1423 = vmatprep.subr.mxu0 0.0
    %1424 = vmatpush1.msra.mxu0 0.0
    %1425 = vmatprep.subr.mxu0 0.0
    %1426 = vmatpush1.msra.mxu0 0.0
    %1427 = vmatprep.subr.mxu0 0.0
    %1428 = vmatpush1.msra.mxu0 0.0
    %1429 = vmatprep.mubr.f32.mxu0 0.0
    %1430 = vmatmul.mubr.f32.gmra.mrb[0].mxu0 %v1363
    %v1431 = vpop.f32.mrb[0].mxu0
    %v1432 = vadd.f32 0.0, %v1431
    %v1433 = vpop.f32.mrb[0].mxu0
    %1434 = vdwg.mxu0
    %v1436 = vrot.slane %v1432, 6
    %v1438 = vadd.f32 %v365, %v1436
    %v1439 = vxor.u32 %v1438, 2147483648
    %v1440 = vmul.f32 %v1439, 1.442695
    %v1441 = vpow.pop %v1440
    %v1442 = vadd.f32 %v1441, 1.0
    %v1443 = vrcp.pop %v1442
    %v1444 = vmul.f32 1.0, %v1443
    %v1445 = vtanh.pop %v1438
    %v1447 = vrot.slane %v1350, 6
    %v1449 = vmul.f32 %v1444, %v1447
    %1451 = vrot.lane.b32.xlu0 %v1445, 64
    %v1452 = vpop.permute.xlu0 %1451
    %v1454 = vmul.f32 %v1444, %v1452
    %1456 = vrot.lane.b32.xlu0 %v1454, 32
    %v1457 = vpop.permute.xlu0 %1456
    %v1459 = vadd.f32 %v1449, %v1457
    %v1460 = vtanh.pop %v1459
    %1462 = vrot.lane.b32.xlu0 %v1460, 64
    %v1463 = vpop.permute.xlu0 %1462
    %v1465 = vmul.f32 %v1444, %v1463
    %1467 = vrot.lane.b32.xlu0 %v1465, 32
    %v1468 = vpop.permute.xlu0 %1467
    %1470 = vst.msk [vmem:[#allocation2 + $0x7] sm:$0x4] %vm580, %v1468
    %1471 = vst.msk [vmem:[#allocation2 + $0x14] sm:$0x8] %vm582, %v1468
    %v1472 = vrot.slane %v1465, 2
    %1473 = vrot.lane.b32.xlu0 %v1472, 32
    %v1474 = vpop.permute.xlu0 %1473
    %v1475 = vsel %vm43, %v1474, 0
    %1477 = vmatprep.subr.mxu0 0.0
    %1478 = vmatpush1.msra.mxu0 %v25
    %1479 = vmatprep.subr.mxu0 0.0
    %1480 = vmatpush1.msra.mxu0 %v26
    %1481 = vmatprep.subr.mxu0 0.0
    %1482 = vmatpush1.msra.mxu0 %v27
    %1483 = vmatprep.subr.mxu0 0.0
    %1484 = vmatpush1.msra.mxu0 %v28
    %1485 = vmatprep.subr.mxu0 0.0
    %1486 = vmatpush1.msra.mxu0 0.0
    %1487 = vmatprep.subr.mxu0 0.0
    %1488 = vmatpush1.msra.mxu0 0.0
    %1489 = vmatprep.subr.mxu0 0.0
    %1490 = vmatpush1.msra.mxu0 0.0
    %1491 = vmatprep.subr.mxu0 0.0
    %1492 = vmatpush1.msra.mxu0 0.0
    %1493 = vmatprep.subr.mxu0 0.0
    %1494 = vmatpush1.msra.mxu0 0.0
    %1495 = vmatprep.subr.mxu0 0.0
    %1496 = vmatpush1.msra.mxu0 0.0
    %1497 = vmatprep.subr.mxu0 0.0
    %1498 = vmatpush1.msra.mxu0 0.0
    %1499 = vmatprep.subr.mxu0 0.0
    %1500 = vmatpush1.msra.mxu0 0.0
    %1501 = vmatprep.subr.mxu0 0.0
    %1502 = vmatpush1.msra.mxu0 0.0
    %1503 = vmatprep.subr.mxu0 0.0
    %1504 = vmatpush1.msra.mxu0 0.0
    %1505 = vmatprep.subr.mxu0 0.0
    %1506 = vmatpush1.msra.mxu0 0.0
    %1507 = vmatprep.subr.mxu0 0.0
    %1508 = vmatpush1.msra.mxu0 0.0
    %1509 = vmatprep.subr.mxu0 0.0
    %1510 = vmatpush1.msra.mxu0 0.0
    %1511 = vmatprep.subr.mxu0 0.0
    %1512 = vmatpush1.msra.mxu0 0.0
    %1513 = vmatprep.subr.mxu0 0.0
    %1514 = vmatpush1.msra.mxu0 0.0
    %1515 = vmatprep.subr.mxu0 0.0
    %1516 = vmatpush1.msra.mxu0 0.0
    %1517 = vmatprep.subr.mxu0 0.0
    %1518 = vmatpush1.msra.mxu0 0.0
    %1519 = vmatprep.subr.mxu0 0.0
    %1520 = vmatpush1.msra.mxu0 0.0
    %1521 = vmatprep.subr.mxu0 0.0
    %1522 = vmatpush1.msra.mxu0 0.0
    %1523 = vmatprep.subr.mxu0 0.0
    %1524 = vmatpush1.msra.mxu0 0.0
    %1525 = vmatprep.subr.mxu0 0.0
    %1526 = vmatpush1.msra.mxu0 0.0
    %1527 = vmatprep.subr.mxu0 0.0
    %1528 = vmatpush1.msra.mxu0 0.0
    %1529 = vmatprep.subr.mxu0 0.0
    %1530 = vmatpush1.msra.mxu0 0.0
    %1531 = vmatprep.subr.mxu0 0.0
    %1532 = vmatpush1.msra.mxu0 0.0
    %1533 = vmatprep.subr.mxu0 0.0
    %1534 = vmatpush1.msra.mxu0 0.0
    %1535 = vmatprep.subr.mxu0 0.0
    %1536 = vmatpush1.msra.mxu0 0.0
    %1537 = vmatprep.subr.mxu0 0.0
    %1538 = vmatpush1.msra.mxu0 0.0
    %1539 = vmatprep.subr.mxu0 0.0
    %1540 = vmatpush1.msra.mxu0 0.0
    %1541 = vmatprep.mubr.f32.mxu0 0.0
    %1542 = vmatmul.mubr.f32.gmra.mrb[0].mxu0 %v1475
    %v1543 = vpop.f32.mrb[0].mxu0
    %v1544 = vadd.f32 0.0, %v1543
    %v1545 = vpop.f32.mrb[0].mxu0
    %1546 = vdwg.mxu0
    %v1548 = vrot.slane %v1544, 4
    %v1550 = vadd.f32 %v365, %v1548
    %v1551 = vxor.u32 %v1550, 2147483648
    %v1552 = vmul.f32 %v1551, 1.442695
    %v1553 = vpow.pop %v1552
    %v1554 = vadd.f32 %v1553, 1.0
    %v1555 = vrcp.pop %v1554
    %v1556 = vmul.f32 1.0, %v1555
    %v1557 = vtanh.pop %v1550
    %v1559 = vrot.slane %v1459, 6
    %v1561 = vmul.f32 %v1556, %v1559
    %1563 = vrot.lane.b32.xlu0 %v1557, 64
    %v1564 = vpop.permute.xlu0 %1563
    %v1566 = vmul.f32 %v1556, %v1564
    %1568 = vrot.lane.b32.xlu0 %v1566, 32
    %v1569 = vpop.permute.xlu0 %1568
    %v1571 = vadd.f32 %v1561, %v1569
    %v1572 = vtanh.pop %v1571
    %1574 = vrot.lane.b32.xlu0 %v1572, 64
    %v1575 = vpop.permute.xlu0 %1574
    %v1577 = vmul.f32 %v1556, %v1575
    %1579 = vrot.lane.b32.xlu0 %v1577, 32
    %v1580 = vpop.permute.xlu0 %1579
    %1582 = vst.msk [vmem:[#allocation2 + $0x6] sm:$0x10] %vm694, %v1580
    %1583 = vst.msk [vmem:[#allocation2 + $0x13] sm:$0x20] %vm696, %v1580
    %v1584 = vrot.slane %v1577, 4
    %1585 = vrot.lane.b32.xlu0 %v1584, 32
    %v1586 = vpop.permute.xlu0 %1585
    %v1587 = vsel %vm43, %v1586, 0
    %1589 = vmatprep.subr.mxu0 0.0
    %1590 = vmatpush1.msra.mxu0 %v25
    %1591 = vmatprep.subr.mxu0 0.0
    %1592 = vmatpush1.msra.mxu0 %v26
    %1593 = vmatprep.subr.mxu0 0.0
    %1594 = vmatpush1.msra.mxu0 %v27
    %1595 = vmatprep.subr.mxu0 0.0
    %1596 = vmatpush1.msra.mxu0 %v28
    %1597 = vmatprep.subr.mxu0 0.0
    %1598 = vmatpush1.msra.mxu0 0.0
    %1599 = vmatprep.subr.mxu0 0.0
    %1600 = vmatpush1.msra.mxu0 0.0
    %1601 = vmatprep.subr.mxu0 0.0
    %1602 = vmatpush1.msra.mxu0 0.0
    %1603 = vmatprep.subr.mxu0 0.0
    %1604 = vmatpush1.msra.mxu0 0.0
    %1605 = vmatprep.subr.mxu0 0.0
    %1606 = vmatpush1.msra.mxu0 0.0
    %1607 = vmatprep.subr.mxu0 0.0
    %1608 = vmatpush1.msra.mxu0 0.0
    %1609 = vmatprep.subr.mxu0 0.0
    %1610 = vmatpush1.msra.mxu0 0.0
    %1611 = vmatprep.subr.mxu0 0.0
    %1612 = vmatpush1.msra.mxu0 0.0
    %1613 = vmatprep.subr.mxu0 0.0
    %1614 = vmatpush1.msra.mxu0 0.0
    %1615 = vmatprep.subr.mxu0 0.0
    %1616 = vmatpush1.msra.mxu0 0.0
    %1617 = vmatprep.subr.mxu0 0.0
    %1618 = vmatpush1.msra.mxu0 0.0
    %1619 = vmatprep.subr.mxu0 0.0
    %1620 = vmatpush1.msra.mxu0 0.0
    %1621 = vmatprep.subr.mxu0 0.0
    %1622 = vmatpush1.msra.mxu0 0.0
    %1623 = vmatprep.subr.mxu0 0.0
    %1624 = vmatpush1.msra.mxu0 0.0
    %1625 = vmatprep.subr.mxu0 0.0
    %1626 = vmatpush1.msra.mxu0 0.0
    %1627 = vmatprep.subr.mxu0 0.0
    %1628 = vmatpush1.msra.mxu0 0.0
    %1629 = vmatprep.subr.mxu0 0.0
    %1630 = vmatpush1.msra.mxu0 0.0
    %1631 = vmatprep.subr.mxu0 0.0
    %1632 = vmatpush1.msra.mxu0 0.0
    %1633 = vmatprep.subr.mxu0 0.0
    %1634 = vmatpush1.msra.mxu0 0.0
    %1635 = vmatprep.subr.mxu0 0.0
    %1636 = vmatpush1.msra.mxu0 0.0
    %1637 = vmatprep.subr.mxu0 0.0
    %1638 = vmatpush1.msra.mxu0 0.0
    %1639 = vmatprep.subr.mxu0 0.0
    %1640 = vmatpush1.msra.mxu0 0.0
    %1641 = vmatprep.subr.mxu0 0.0
    %1642 = vmatpush1.msra.mxu0 0.0
    %1643 = vmatprep.subr.mxu0 0.0
    %1644 = vmatpush1.msra.mxu0 0.0
    %1645 = vmatprep.subr.mxu0 0.0
    %1646 = vmatpush1.msra.mxu0 0.0
    %1647 = vmatprep.subr.mxu0 0.0
    %1648 = vmatpush1.msra.mxu0 0.0
    %1649 = vmatprep.subr.mxu0 0.0
    %1650 = vmatpush1.msra.mxu0 0.0
    %1651 = vmatprep.subr.mxu0 0.0
    %1652 = vmatpush1.msra.mxu0 0.0
    %1653 = vmatprep.mubr.f32.mxu0 0.0
    %1654 = vmatmul.mubr.f32.gmra.mrb[0].mxu0 %v1587
    %v1655 = vpop.f32.mrb[0].mxu0
    %v1656 = vadd.f32 0.0, %v1655
    %v1657 = vpop.f32.mrb[0].mxu0
    %1658 = vdwg.mxu0
    %v1660 = vrot.slane %v1656, 2
    %v1662 = vadd.f32 %v365, %v1660
    %v1663 = vxor.u32 %v1662, 2147483648
    %v1664 = vmul.f32 %v1663, 1.442695
    %v1665 = vpow.pop %v1664
    %v1666 = vadd.f32 %v1665, 1.0
    %v1667 = vrcp.pop %v1666
    %v1668 = vmul.f32 1.0, %v1667
    %v1669 = vtanh.pop %v1662
    %v1671 = vrot.slane %v1571, 6
    %v1673 = vmul.f32 %v1668, %v1671
    %1675 = vrot.lane.b32.xlu0 %v1669, 64
    %v1676 = vpop.permute.xlu0 %1675
    %v1678 = vmul.f32 %v1668, %v1676
    %1680 = vrot.lane.b32.xlu0 %v1678, 32
    %v1681 = vpop.permute.xlu0 %1680
    %v1683 = vadd.f32 %v1673, %v1681
    %v1684 = vtanh.pop %v1683
    %1686 = vrot.lane.b32.xlu0 %v1684, 64
    %v1687 = vpop.permute.xlu0 %1686
    %v1689 = vmul.f32 %v1668, %v1687
    %1691 = vrot.lane.b32.xlu0 %v1689, 32
    %v1692 = vpop.permute.xlu0 %1691
    %1694 = vst.msk [vmem:[#allocation2 + $0x5] sm:$0x40] %vm808, %v1692
    %1695 = vst.msk [vmem:[#allocation2 + $0x12] sm:$0x80] %vm810, %v1692
    %v1696 = vrot.slane %v1689, 6
    %1697 = vrot.lane.b32.xlu0 %v1696, 32
    %v1698 = vpop.permute.xlu0 %1697
    %v1699 = vsel %vm43, %v1698, 0
    %1701 = vmatprep.subr.mxu0 0.0
    %1702 = vmatpush1.msra.mxu0 %v25
    %1703 = vmatprep.subr.mxu0 0.0
    %1704 = vmatpush1.msra.mxu0 %v26
    %1705 = vmatprep.subr.mxu0 0.0
    %1706 = vmatpush1.msra.mxu0 %v27
    %1707 = vmatprep.subr.mxu0 0.0
    %1708 = vmatpush1.msra.mxu0 %v28
    %1709 = vmatprep.subr.mxu0 0.0
    %1710 = vmatpush1.msra.mxu0 0.0
    %1711 = vmatprep.subr.mxu0 0.0
    %1712 = vmatpush1.msra.mxu0 0.0
    %1713 = vmatprep.subr.mxu0 0.0
    %1714 = vmatpush1.msra.mxu0 0.0
    %1715 = vmatprep.subr.mxu0 0.0
    %1716 = vmatpush1.msra.mxu0 0.0
    %1717 = vmatprep.subr.mxu0 0.0
    %1718 = vmatpush1.msra.mxu0 0.0
    %1719 = vmatprep.subr.mxu0 0.0
    %1720 = vmatpush1.msra.mxu0 0.0
    %1721 = vmatprep.subr.mxu0 0.0
    %1722 = vmatpush1.msra.mxu0 0.0
    %1723 = vmatprep.subr.mxu0 0.0
    %1724 = vmatpush1.msra.mxu0 0.0
    %1725 = vmatprep.subr.mxu0 0.0
    %1726 = vmatpush1.msra.mxu0 0.0
    %1727 = vmatprep.subr.mxu0 0.0
    %1728 = vmatpush1.msra.mxu0 0.0
    %1729 = vmatprep.subr.mxu0 0.0
    %1730 = vmatpush1.msra.mxu0 0.0
    %1731 = vmatprep.subr.mxu0 0.0
    %1732 = vmatpush1.msra.mxu0 0.0
    %1733 = vmatprep.subr.mxu0 0.0
    %1734 = vmatpush1.msra.mxu0 0.0
    %1735 = vmatprep.subr.mxu0 0.0
    %1736 = vmatpush1.msra.mxu0 0.0
    %1737 = vmatprep.subr.mxu0 0.0
    %1738 = vmatpush1.msra.mxu0 0.0
    %1739 = vmatprep.subr.mxu0 0.0
    %1740 = vmatpush1.msra.mxu0 0.0
    %1741 = vmatprep.subr.mxu0 0.0
    %1742 = vmatpush1.msra.mxu0 0.0
    %1743 = vmatprep.subr.mxu0 0.0
    %1744 = vmatpush1.msra.mxu0 0.0
    %1745 = vmatprep.subr.mxu0 0.0
    %1746 = vmatpush1.msra.mxu0 0.0
    %1747 = vmatprep.subr.mxu0 0.0
    %1748 = vmatpush1.msra.mxu0 0.0
    %1749 = vmatprep.subr.mxu0 0.0
    %1750 = vmatpush1.msra.mxu0 0.0
    %1751 = vmatprep.subr.mxu0 0.0
    %1752 = vmatpush1.msra.mxu0 0.0
    %1753 = vmatprep.subr.mxu0 0.0
    %1754 = vmatpush1.msra.mxu0 0.0
    %1755 = vmatprep.subr.mxu0 0.0
    %1756 = vmatpush1.msra.mxu0 0.0
    %1757 = vmatprep.subr.mxu0 0.0
    %1758 = vmatpush1.msra.mxu0 0.0
    %1759 = vmatprep.subr.mxu0 0.0
    %1760 = vmatpush1.msra.mxu0 0.0
    %1761 = vmatprep.subr.mxu0 0.0
    %1762 = vmatpush1.msra.mxu0 0.0
    %1763 = vmatprep.subr.mxu0 0.0
    %1764 = vmatpush1.msra.mxu0 0.0
    %1765 = vmatprep.mubr.f32.mxu0 0.0
    %1766 = vmatmul.mubr.f32.gmra.mrb[0].mxu0 %v1699
    %v1767 = vpop.f32.mrb[0].mxu0
    %v1768 = vadd.f32 0.0, %v1767
    %v1769 = vpop.f32.mrb[0].mxu0
    %1770 = vdwg.mxu0
    %v1771 = vadd.f32 %v366, %v1768
    %v1772 = vxor.u32 %v1771, 2147483648
    %v1773 = vmul.f32 %v1772, 1.442695
    %v1774 = vpow.pop %v1773
    %v1775 = vadd.f32 %v1774, 1.0
    %v1776 = vrcp.pop %v1775
    %v1777 = vmul.f32 1.0, %v1776
    %v1778 = vtanh.pop %v1771
    %v1780 = vrot.slane %v1683, 6
    %v1782 = vmul.f32 %v1777, %v1780
    %1784 = vrot.lane.b32.xlu0 %v1778, 64
    %v1785 = vpop.permute.xlu0 %1784
    %v1787 = vmul.f32 %v1777, %v1785
    %1789 = vrot.lane.b32.xlu0 %v1787, 32
    %v1790 = vpop.permute.xlu0 %1789
    %v1792 = vadd.f32 %v1782, %v1790
    %v1793 = vtanh.pop %v1792
    %1795 = vrot.lane.b32.xlu0 %v1793, 64
    %v1796 = vpop.permute.xlu0 %1795
    %v1798 = vmul.f32 %v1777, %v1796
    %1800 = vrot.lane.b32.xlu0 %v1798, 32
    %v1801 = vpop.permute.xlu0 %1800
    %1803 = vst.msk [vmem:[#allocation2 + $0xc] sm:$0x1] %vm469, %v1801
    %1804 = vst.msk [vmem:[#allocation2 + $0x19] sm:$0x2] %vm471, %v1801
    %v1805 = vsel %vm43, %v1801, 0
    %1807 = vmatprep.subr.mxu0 0.0
    %1808 = vmatpush1.msra.mxu0 %v25
    %1809 = vmatprep.subr.mxu0 0.0
    %1810 = vmatpush1.msra.mxu0 %v26
    %1811 = vmatprep.subr.mxu0 0.0
    %1812 = vmatpush1.msra.mxu0 %v27
    %1813 = vmatprep.subr.mxu0 0.0
    %1814 = vmatpush1.msra.mxu0 %v28
    %1815 = vmatprep.subr.mxu0 0.0
    %1816 = vmatpush1.msra.mxu0 0.0
    %1817 = vmatprep.subr.mxu0 0.0
    %1818 = vmatpush1.msra.mxu0 0.0
    %1819 = vmatprep.subr.mxu0 0.0
    %1820 = vmatpush1.msra.mxu0 0.0
    %1821 = vmatprep.subr.mxu0 0.0
    %1822 = vmatpush1.msra.mxu0 0.0
    %1823 = vmatprep.subr.mxu0 0.0
    %1824 = vmatpush1.msra.mxu0 0.0
    %1825 = vmatprep.subr.mxu0 0.0
    %1826 = vmatpush1.msra.mxu0 0.0
    %1827 = vmatprep.subr.mxu0 0.0
    %1828 = vmatpush1.msra.mxu0 0.0
    %1829 = vmatprep.subr.mxu0 0.0
    %1830 = vmatpush1.msra.mxu0 0.0
    %1831 = vmatprep.subr.mxu0 0.0
    %1832 = vmatpush1.msra.mxu0 0.0
    %1833 = vmatprep.subr.mxu0 0.0
    %1834 = vmatpush1.msra.mxu0 0.0
    %1835 = vmatprep.subr.mxu0 0.0
    %1836 = vmatpush1.msra.mxu0 0.0
    %1837 = vmatprep.subr.mxu0 0.0
    %1838 = vmatpush1.msra.mxu0 0.0
    %1839 = vmatprep.subr.mxu0 0.0
    %1840 = vmatpush1.msra.mxu0 0.0
    %1841 = vmatprep.subr.mxu0 0.0
    %1842 = vmatpush1.msra.mxu0 0.0
    %1843 = vmatprep.subr.mxu0 0.0
    %1844 = vmatpush1.msra.mxu0 0.0
    %1845 = vmatprep.subr.mxu0 0.0
    %1846 = vmatpush1.msra.mxu0 0.0
    %1847 = vmatprep.subr.mxu0 0.0
    %1848 = vmatpush1.msra.mxu0 0.0
    %1849 = vmatprep.subr.mxu0 0.0
    %1850 = vmatpush1.msra.mxu0 0.0
    %1851 = vmatprep.subr.mxu0 0.0
    %1852 = vmatpush1.msra.mxu0 0.0
    %1853 = vmatprep.subr.mxu0 0.0
    %1854 = vmatpush1.msra.mxu0 0.0
    %1855 = vmatprep.subr.mxu0 0.0
    %1856 = vmatpush1.msra.mxu0 0.0
    %1857 = vmatprep.subr.mxu0 0.0
    %1858 = vmatpush1.msra.mxu0 0.0
    %1859 = vmatprep.subr.mxu0 0.0
    %1860 = vmatpush1.msra.mxu0 0.0
    %1861 = vmatprep.subr.mxu0 0.0
    %1862 = vmatpush1.msra.mxu0 0.0
    %1863 = vmatprep.subr.mxu0 0.0
    %1864 = vmatpush1.msra.mxu0 0.0
    %1865 = vmatprep.subr.mxu0 0.0
    %1866 = vmatpush1.msra.mxu0 0.0
    %1867 = vmatprep.subr.mxu0 0.0
    %1868 = vmatpush1.msra.mxu0 0.0
    %1869 = vmatprep.subr.mxu0 0.0
    %1870 = vmatpush1.msra.mxu0 0.0
    %1871 = vmatprep.mubr.f32.mxu0 0.0
    %1872 = vmatmul.mubr.f32.gmra.mrb[0].mxu0 %v1805
    %v1873 = vpop.f32.mrb[0].mxu0
    %v1874 = vadd.f32 0.0, %v1873
    %v1875 = vpop.f32.mrb[0].mxu0
    %1876 = vdwg.mxu0
    %v1878 = vrot.slane %v1874, 6
    %v1880 = vadd.f32 %v366, %v1878
    %v1881 = vxor.u32 %v1880, 2147483648
    %v1882 = vmul.f32 %v1881, 1.442695
    %v1883 = vpow.pop %v1882
    %v1884 = vadd.f32 %v1883, 1.0
    %v1885 = vrcp.pop %v1884
    %v1886 = vmul.f32 1.0, %v1885
    %v1887 = vtanh.pop %v1880
    %v1889 = vrot.slane %v1792, 6
    %v1891 = vmul.f32 %v1886, %v1889
    %1893 = vrot.lane.b32.xlu0 %v1887, 64
    %v1894 = vpop.permute.xlu0 %1893
    %v1896 = vmul.f32 %v1886, %v1894
    %1898 = vrot.lane.b32.xlu0 %v1896, 32
    %v1899 = vpop.permute.xlu0 %1898
    %v1901 = vadd.f32 %v1891, %v1899
    %v1902 = vtanh.pop %v1901
    %1904 = vrot.lane.b32.xlu0 %v1902, 64
    %v1905 = vpop.permute.xlu0 %1904
    %v1907 = vmul.f32 %v1886, %v1905
    %1909 = vrot.lane.b32.xlu0 %v1907, 32
    %v1910 = vpop.permute.xlu0 %1909
    %1912 = vst.msk [vmem:[#allocation2 + $0xb] sm:$0x4] %vm580, %v1910
    %1913 = vst.msk [vmem:[#allocation2 + $0x18] sm:$0x8] %vm582, %v1910
    %v1914 = vld [vmem:[%s0 + $0x20] sm:$0xff]
    %v1915 = vld [vmem:[%s0 + $0x28] sm:$0xff]
    %v1916 = vld [vmem:[%s0 + $0x30] sm:$0xff]
    %v1917 = vld [vmem:[%s0 + $0x38] sm:$0xff]
    %v1918 = vlaneseq
    %v1919 = vshrl.u32 %v1918, 7
    %v1920 = vsub.s32 0, %v1919
    %v1921 = vrot.slane %v34, %v1920
    %v1923 = vsel %vm43, %v1914, 0
    %v1926 = vsel %vm43, %v1915, 0
    %v1929 = vsel %vm43, %v1916, 0
    %v1932 = vsel %vm43, %v1917, 0
    %1934 = vmatprep.subr.mxu0 0.0
    %1935 = vmatpush1.msra.mxu0 %v29
    %1936 = vmatprep.subr.mxu0 0.0
    %1937 = vmatpush1.msra.mxu0 %v30
    %1938 = vmatprep.subr.mxu0 0.0
    %1939 = vmatpush1.msra.mxu0 %v31
    %1940 = vmatprep.subr.mxu0 0.0
    %1941 = vmatpush1.msra.mxu0 %v32
    %1942 = vmatprep.subr.mxu0 0.0
    %1943 = vmatpush1.msra.mxu0 0.0
    %1944 = vmatprep.subr.mxu0 0.0
    %1945 = vmatpush1.msra.mxu0 0.0
    %1946 = vmatprep.subr.mxu0 0.0
    %1947 = vmatpush1.msra.mxu0 0.0
    %1948 = vmatprep.subr.mxu0 0.0
    %1949 = vmatpush1.msra.mxu0 0.0
    %1950 = vmatprep.subr.mxu0 0.0
    %1951 = vmatpush1.msra.mxu0 0.0
    %1952 = vmatprep.subr.mxu0 0.0
    %1953 = vmatpush1.msra.mxu0 0.0
    %1954 = vmatprep.subr.mxu0 0.0
    %1955 = vmatpush1.msra.mxu0 0.0
    %1956 = vmatprep.subr.mxu0 0.0
    %1957 = vmatpush1.msra.mxu0 0.0
    %1958 = vmatprep.subr.mxu0 0.0
    %1959 = vmatpush1.msra.mxu0 0.0
    %1960 = vmatprep.subr.mxu0 0.0
    %1961 = vmatpush1.msra.mxu0 0.0
    %1962 = vmatprep.subr.mxu0 0.0
    %1963 = vmatpush1.msra.mxu0 0.0
    %1964 = vmatprep.subr.mxu0 0.0
    %1965 = vmatpush1.msra.mxu0 0.0
    %1966 = vmatprep.subr.mxu0 0.0
    %1967 = vmatpush1.msra.mxu0 0.0
    %1968 = vmatprep.subr.mxu0 0.0
    %1969 = vmatpush1.msra.mxu0 0.0
    %1970 = vmatprep.subr.mxu0 0.0
    %1971 = vmatpush1.msra.mxu0 0.0
    %1972 = vmatprep.subr.mxu0 0.0
    %1973 = vmatpush1.msra.mxu0 0.0
    %1974 = vmatprep.subr.mxu0 0.0
    %1975 = vmatpush1.msra.mxu0 0.0
    %1976 = vmatprep.subr.mxu0 0.0
    %1977 = vmatpush1.msra.mxu0 0.0
    %1978 = vmatprep.subr.mxu0 0.0
    %1979 = vmatpush1.msra.mxu0 0.0
    %1980 = vmatprep.subr.mxu0 0.0
    %1981 = vmatpush1.msra.mxu0 0.0
    %1982 = vmatprep.subr.mxu0 0.0
    %1983 = vmatpush1.msra.mxu0 0.0
    %1984 = vmatprep.subr.mxu0 0.0
    %1985 = vmatpush1.msra.mxu0 0.0
    %1986 = vmatprep.subr.mxu0 0.0
    %1987 = vmatpush1.msra.mxu0 0.0
    %1988 = vmatprep.subr.mxu0 0.0
    %1989 = vmatpush1.msra.mxu0 0.0
    %1990 = vmatprep.subr.mxu0 0.0
    %1991 = vmatpush1.msra.mxu0 0.0
    %1992 = vmatprep.subr.mxu0 0.0
    %1993 = vmatpush1.msra.mxu0 0.0
    %1994 = vmatprep.subr.mxu0 0.0
    %1995 = vmatpush1.msra.mxu0 0.0
    %1996 = vmatprep.subr.mxu0 0.0
    %1997 = vmatpush1.msra.mxu0 0.0
    %1998 = vmatprep.mubr.f32.mxu0 0.0
    %1999 = vmatmul.mubr.f32.gmra.mrb[0].mxu0 %v1923
    %v2000 = vpop.f32.mrb[0].mxu0
    %v2001 = vadd.f32 %v1921, %v2000
    %v2002 = vpop.f32.mrb[0].mxu0
    %2003 = vmatprep.mubr.f32.mxu0 0.0
    %2004 = vmatmul.mubr.f32.gmra.mrb[0].mxu0 %v1926
    %v2005 = vpop.f32.mrb[0].mxu0
    %v2006 = vadd.f32 %v1921, %v2005
    %v2007 = vpop.f32.mrb[0].mxu0
    %2008 = vmatprep.mubr.f32.mxu0 0.0
    %2009 = vmatmul.mubr.f32.gmra.mrb[0].mxu0 %v1929
    %v2010 = vpop.f32.mrb[0].mxu0
    %v2011 = vadd.f32 %v1921, %v2010
    %v2012 = vpop.f32.mrb[0].mxu0
    %2013 = vmatprep.mubr.f32.mxu0 0.0
    %2014 = vmatmul.mubr.f32.gmra.mrb[0].mxu0 %v1932
    %v2015 = vpop.f32.mrb[0].mxu0
    %v2016 = vadd.f32 %v1921, %v2015
    %v2017 = vpop.f32.mrb[0].mxu0
    %2018 = vdwg.mxu0
    %v2019 = vld [vmem:[#allocation2] sm:$0xff]
    %v2020 = vld [vmem:[#allocation2 + $0x8] sm:$0x3f]
    %v2022 = vsel %vm43, %v2019, 0
    %v2025 = vsel %vm43, %v2020, 0
    %2027 = vmatprep.subr.mxu0 0.0
    %2028 = vmatpush1.msra.mxu0 %v29
    %2029 = vmatprep.subr.mxu0 0.0
    %2030 = vmatpush1.msra.mxu0 %v30
    %2031 = vmatprep.subr.mxu0 0.0
    %2032 = vmatpush1.msra.mxu0 %v31
    %2033 = vmatprep.subr.mxu0 0.0
    %2034 = vmatpush1.msra.mxu0 %v32
    %2035 = vmatprep.subr.mxu0 0.0
    %2036 = vmatpush1.msra.mxu0 0.0
    %2037 = vmatprep.subr.mxu0 0.0
    %2038 = vmatpush1.msra.mxu0 0.0
    %2039 = vmatprep.subr.mxu0 0.0
    %2040 = vmatpush1.msra.mxu0 0.0
    %2041 = vmatprep.subr.mxu0 0.0
    %2042 = vmatpush1.msra.mxu0 0.0
    %2043 = vmatprep.subr.mxu0 0.0
    %2044 = vmatpush1.msra.mxu0 0.0
    %2045 = vmatprep.subr.mxu0 0.0
    %2046 = vmatpush1.msra.mxu0 0.0
    %2047 = vmatprep.subr.mxu0 0.0
    %2048 = vmatpush1.msra.mxu0 0.0
    %2049 = vmatprep.subr.mxu0 0.0
    %2050 = vmatpush1.msra.mxu0 0.0
    %2051 = vmatprep.subr.mxu0 0.0
    %2052 = vmatpush1.msra.mxu0 0.0
    %2053 = vmatprep.subr.mxu0 0.0
    %2054 = vmatpush1.msra.mxu0 0.0
    %2055 = vmatprep.subr.mxu0 0.0
    %2056 = vmatpush1.msra.mxu0 0.0
    %2057 = vmatprep.subr.mxu0 0.0
    %2058 = vmatpush1.msra.mxu0 0.0
    %2059 = vmatprep.subr.mxu0 0.0
    %2060 = vmatpush1.msra.mxu0 0.0
    %2061 = vmatprep.subr.mxu0 0.0
    %2062 = vmatpush1.msra.mxu0 0.0
    %2063 = vmatprep.subr.mxu0 0.0
    %2064 = vmatpush1.msra.mxu0 0.0
    %2065 = vmatprep.subr.mxu0 0.0
    %2066 = vmatpush1.msra.mxu0 0.0
    %2067 = vmatprep.subr.mxu0 0.0
    %2068 = vmatpush1.msra.mxu0 0.0
    %2069 = vmatprep.subr.mxu0 0.0
    %2070 = vmatpush1.msra.mxu0 0.0
    %2071 = vmatprep.subr.mxu0 0.0
    %2072 = vmatpush1.msra.mxu0 0.0
    %2073 = vmatprep.subr.mxu0 0.0
    %2074 = vmatpush1.msra.mxu0 0.0
    %2075 = vmatprep.subr.mxu0 0.0
    %2076 = vmatpush1.msra.mxu0 0.0
    %2077 = vmatprep.subr.mxu0 0.0
    %2078 = vmatpush1.msra.mxu0 0.0
    %2079 = vmatprep.subr.mxu0 0.0
    %2080 = vmatpush1.msra.mxu0 0.0
    %2081 = vmatprep.subr.mxu0 0.0
    %2082 = vmatpush1.msra.mxu0 0.0
    %2083 = vmatprep.subr.mxu0 0.0
    %2084 = vmatpush1.msra.mxu0 0.0
    %2085 = vmatprep.subr.mxu0 0.0
    %2086 = vmatpush1.msra.mxu0 0.0
    %2087 = vmatprep.subr.mxu0 0.0
    %2088 = vmatpush1.msra.mxu0 0.0
    %2089 = vmatprep.subr.mxu0 0.0
    %2090 = vmatpush1.msra.mxu0 0.0
    %2091 = vmatprep.mubr.f32.mxu0 0.0
    %2092 = vmatmul.mubr.f32.gmra.mrb[0].mxu0 %v2022
    %v2093 = vpop.f32.mrb[0].mxu0
    %v2094 = vadd.f32 %v1921, %v2093
    %v2095 = vpop.f32.mrb[0].mxu0
    %2096 = vmatprep.mubr.f32.mxu0 0.0
    %2097 = vmatmul.mubr.f32.gmra.mrb[0].mxu0 %v2025
    %v2098 = vpop.f32.mrb[0].mxu0
    %v2099 = vadd.f32 %v1921, %v2098
    %v2100 = vpop.f32.mrb[0].mxu0
    %2101 = vdwg.mxu0
    %v2102 = vmax.f32 %v2001, %v2006
    %v2103 = vmax.f32 %v2011, %v2016
    %v2104 = vmax.f32 %v2102, %v2103
    %v2105 = vrot.slane %v2104, 4
    %v2106 = vmax.f32 %v2104, %v2105
    %v2107 = vrot.slane %v2106, 2
    %v2108 = vmax.f32 %v2106, %v2107
    %v2109 = vrot.slane %v2108, 1
    %v2110 = vmax.f32 %v2108, %v2109
    %vm2111 = vcmask 1045504
    %v2112 = vsel %vm2111, %v2099, -inf
    %v2113 = vmax.f32 %v2094, %v2112
    %v2114 = vrot.slane %v2113, 4
    %v2115 = vmax.f32 %v2113, %v2114
    %v2116 = vrot.slane %v2115, 2
    %v2117 = vmax.f32 %v2115, %v2116
    %v2118 = vrot.slane %v2117, 1
    %v2119 = vmax.f32 %v2117, %v2118
    %v2120 = vmax.f32 %v2110, %v2119
    %v2121 = vsub.f32 %v2001, %v2120
    %v2122 = vsub.f32 %v2006, %v2120
    %v2123 = vsub.f32 %v2011, %v2120
    %v2124 = vsub.f32 %v2016, %v2120
    %v2125 = vmul.f32 %v2121, 1.442695
    %v2126 = vpow.pop %v2125
    %v2127 = vmul.f32 %v2122, 1.442695
    %v2128 = vpow.pop %v2127
    %v2129 = vmul.f32 %v2123, 1.442695
    %v2130 = vpow.pop %v2129
    %v2131 = vmul.f32 %v2124, 1.442695
    %v2132 = vpow.pop %v2131
    %v2133 = vadd.f32 %v2126, %v2128
    %v2134 = vadd.f32 %v2133, %v2130
    %v2135 = vadd.f32 %v2134, %v2132
    %v2136 = vrot.slane %v2135, 4
    %v2137 = vadd.f32 %v2135, %v2136
    %v2138 = vrot.slane %v2137, 2
    %v2139 = vadd.f32 %v2137, %v2138
    %v2140 = vrot.slane %v2139, 1
    %v2141 = vadd.f32 %v2139, %v2140
    %v2142 = vsub.f32 %v2094, %v2120
    %v2143 = vsub.f32 %v2099, %v2120
    %v2144 = vmul.f32 %v2142, 1.442695
    %v2145 = vpow.pop %v2144
    %v2146 = vmul.f32 %v2143, 1.442695
    %v2147 = vpow.pop %v2146
    %v2148 = vsel %vm2111, %v2147, 0.0
    %v2149 = vadd.f32 %v2145, %v2148
    %v2150 = vrot.slane %v2149, 4
    %v2151 = vadd.f32 %v2149, %v2150
    %v2152 = vrot.slane %v2151, 2
    %v2153 = vadd.f32 %v2151, %v2152
    %v2154 = vrot.slane %v2153, 1
    %v2155 = vadd.f32 %v2153, %v2154
    %v2156 = vadd.f32 %v2141, %v2155
    %2157 = vmin.xlane.f32.xlu0 %v2156
    %v2158 = vpop.xlane.xlu0 %2157
    %v2159 = vrcp.pop %v2158
    %vm2160 = vcmask 0
    %2161 = vst.msk [vmem:[%s2] sm:$0x1] %vm2160, %v2159
    %v2162 = vld [vmem:[%s0 + $0x40] sm:$0xff]
    %v2163 = vld [vmem:[%s0 + $0x48] sm:$0xff]
    %v2164 = vld [vmem:[%s0 + $0x50] sm:$0xff]
    %v2165 = vld [vmem:[%s0 + $0x58] sm:$0xff]
    %v2167 = vsel %vm43, %v2162, 0
    %v2170 = vsel %vm43, %v2163, 0
    %v2173 = vsel %vm43, %v2164, 0
    %v2176 = vsel %vm43, %v2165, 0
    %2178 = vmatprep.subr.mxu0 0.0
    %2179 = vmatpush1.msra.mxu0 %v29
    %2180 = vmatprep.subr.mxu0 0.0
    %2181 = vmatpush1.msra.mxu0 %v30
    %2182 = vmatprep.subr.mxu0 0.0
    %2183 = vmatpush1.msra.mxu0 %v31
    %2184 = vmatprep.subr.mxu0 0.0
    %2185 = vmatpush1.msra.mxu0 %v32
    %2186 = vmatprep.subr.mxu0 0.0
    %2187 = vmatpush1.msra.mxu0 0.0
    %2188 = vmatprep.subr.mxu0 0.0
    %2189 = vmatpush1.msra.mxu0 0.0
    %2190 = vmatprep.subr.mxu0 0.0
    %2191 = vmatpush1.msra.mxu0 0.0
    %2192 = vmatprep.subr.mxu0 0.0
    %2193 = vmatpush1.msra.mxu0 0.0
    %2194 = vmatprep.subr.mxu0 0.0
    %2195 = vmatpush1.msra.mxu0 0.0
    %2196 = vmatprep.subr.mxu0 0.0
    %2197 = vmatpush1.msra.mxu0 0.0
    %2198 = vmatprep.subr.mxu0 0.0
    %2199 = vmatpush1.msra.mxu0 0.0
    %2200 = vmatprep.subr.mxu0 0.0
    %2201 = vmatpush1.msra.mxu0 0.0
    %2202 = vmatprep.subr.mxu0 0.0
    %2203 = vmatpush1.msra.mxu0 0.0
    %2204 = vmatprep.subr.mxu0 0.0
    %2205 = vmatpush1.msra.mxu0 0.0
    %2206 = vmatprep.subr.mxu0 0.0
    %2207 = vmatpush1.msra.mxu0 0.0
    %2208 = vmatprep.subr.mxu0 0.0
    %2209 = vmatpush1.msra.mxu0 0.0
    %2210 = vmatprep.subr.mxu0 0.0
    %2211 = vmatpush1.msra.mxu0 0.0
    %2212 = vmatprep.subr.mxu0 0.0
    %2213 = vmatpush1.msra.mxu0 0.0
    %2214 = vmatprep.subr.mxu0 0.0
    %2215 = vmatpush1.msra.mxu0 0.0
    %2216 = vmatprep.subr.mxu0 0.0
    %2217 = vmatpush1.msra.mxu0 0.0
    %2218 = vmatprep.subr.mxu0 0.0
    %2219 = vmatpush1.msra.mxu0 0.0
    %2220 = vmatprep.subr.mxu0 0.0
    %2221 = vmatpush1.msra.mxu0 0.0
    %2222 = vmatprep.subr.mxu0 0.0
    %2223 = vmatpush1.msra.mxu0 0.0
    %2224 = vmatprep.subr.mxu0 0.0
    %2225 = vmatpush1.msra.mxu0 0.0
    %2226 = vmatprep.subr.mxu0 0.0
    %2227 = vmatpush1.msra.mxu0 0.0
    %2228 = vmatprep.subr.mxu0 0.0
    %2229 = vmatpush1.msra.mxu0 0.0
    %2230 = vmatprep.subr.mxu0 0.0
    %2231 = vmatpush1.msra.mxu0 0.0
    %2232 = vmatprep.subr.mxu0 0.0
    %2233 = vmatpush1.msra.mxu0 0.0
    %2234 = vmatprep.subr.mxu0 0.0
    %2235 = vmatpush1.msra.mxu0 0.0
    %2236 = vmatprep.subr.mxu0 0.0
    %2237 = vmatpush1.msra.mxu0 0.0
    %2238 = vmatprep.subr.mxu0 0.0
    %2239 = vmatpush1.msra.mxu0 0.0
    %2240 = vmatprep.subr.mxu0 0.0
    %2241 = vmatpush1.msra.mxu0 0.0
    %2242 = vmatprep.mubr.f32.mxu0 0.0
    %2243 = vmatmul.mubr.f32.gmra.mrb[0].mxu0 %v2167
    %v2244 = vpop.f32.mrb[0].mxu0
    %v2245 = vadd.f32 %v1921, %v2244
    %v2246 = vpop.f32.mrb[0].mxu0
    %2247 = vmatprep.mubr.f32.mxu0 0.0
    %2248 = vmatmul.mubr.f32.gmra.mrb[0].mxu0 %v2170
    %v2249 = vpop.f32.mrb[0].mxu0
    %v2250 = vadd.f32 %v1921, %v2249
    %v2251 = vpop.f32.mrb[0].mxu0
    %2252 = vmatprep.mubr.f32.mxu0 0.0
    %2253 = vmatmul.mubr.f32.gmra.mrb[0].mxu0 %v2173
    %v2254 = vpop.f32.mrb[0].mxu0
    %v2255 = vadd.f32 %v1921, %v2254
    %v2256 = vpop.f32.mrb[0].mxu0
    %2257 = vmatprep.mubr.f32.mxu0 0.0
    %2258 = vmatmul.mubr.f32.gmra.mrb[0].mxu0 %v2176
    %v2259 = vpop.f32.mrb[0].mxu0
    %v2260 = vadd.f32 %v1921, %v2259
    %v2261 = vpop.f32.mrb[0].mxu0
    %2262 = vdwg.mxu0
    %v2263 = vld [vmem:[#allocation2 + $0xe] sm:$0xff]
    %v2264 = vld [vmem:[#allocation2 + $0x16] sm:$0x3f]
    %v2266 = vsel %vm43, %v2263, 0
    %v2269 = vsel %vm43, %v2264, 0
    %2271 = vmatprep.subr.mxu0 0.0
    %2272 = vmatpush1.msra.mxu0 %v29
    %2273 = vmatprep.subr.mxu0 0.0
    %2274 = vmatpush1.msra.mxu0 %v30
    %2275 = vmatprep.subr.mxu0 0.0
    %2276 = vmatpush1.msra.mxu0 %v31
    %2277 = vmatprep.subr.mxu0 0.0
    %2278 = vmatpush1.msra.mxu0 %v32
    %2279 = vmatprep.subr.mxu0 0.0
    %2280 = vmatpush1.msra.mxu0 0.0
    %2281 = vmatprep.subr.mxu0 0.0
    %2282 = vmatpush1.msra.mxu0 0.0
    %2283 = vmatprep.subr.mxu0 0.0
    %2284 = vmatpush1.msra.mxu0 0.0
    %2285 = vmatprep.subr.mxu0 0.0
    %2286 = vmatpush1.msra.mxu0 0.0
    %2287 = vmatprep.subr.mxu0 0.0
    %2288 = vmatpush1.msra.mxu0 0.0
    %2289 = vmatprep.subr.mxu0 0.0
    %2290 = vmatpush1.msra.mxu0 0.0
    %2291 = vmatprep.subr.mxu0 0.0
    %2292 = vmatpush1.msra.mxu0 0.0
    %2293 = vmatprep.subr.mxu0 0.0
    %2294 = vmatpush1.msra.mxu0 0.0
    %2295 = vmatprep.subr.mxu0 0.0
    %2296 = vmatpush1.msra.mxu0 0.0
    %2297 = vmatprep.subr.mxu0 0.0
    %2298 = vmatpush1.msra.mxu0 0.0
    %2299 = vmatprep.subr.mxu0 0.0
    %2300 = vmatpush1.msra.mxu0 0.0
    %2301 = vmatprep.subr.mxu0 0.0
    %2302 = vmatpush1.msra.mxu0 0.0
    %2303 = vmatprep.subr.mxu0 0.0
    %2304 = vmatpush1.msra.mxu0 0.0
    %2305 = vmatprep.subr.mxu0 0.0
    %2306 = vmatpush1.msra.mxu0 0.0
    %2307 = vmatprep.subr.mxu0 0.0
    %2308 = vmatpush1.msra.mxu0 0.0
    %2309 = vmatprep.subr.mxu0 0.0
    %2310 = vmatpush1.msra.mxu0 0.0
    %2311 = vmatprep.subr.mxu0 0.0
    %2312 = vmatpush1.msra.mxu0 0.0
    %2313 = vmatprep.subr.mxu0 0.0
    %2314 = vmatpush1.msra.mxu0 0.0
    %2315 = vmatprep.subr.mxu0 0.0
    %2316 = vmatpush1.msra.mxu0 0.0
    %2317 = vmatprep.subr.mxu0 0.0
    %2318 = vmatpush1.msra.mxu0 0.0
    %2319 = vmatprep.subr.mxu0 0.0
    %2320 = vmatpush1.msra.mxu0 0.0
    %2321 = vmatprep.subr.mxu0 0.0
    %2322 = vmatpush1.msra.mxu0 0.0
    %2323 = vmatprep.subr.mxu0 0.0
    %2324 = vmatpush1.msra.mxu0 0.0
    %2325 = vmatprep.subr.mxu0 0.0
    %2326 = vmatpush1.msra.mxu0 0.0
    %2327 = vmatprep.subr.mxu0 0.0
    %2328 = vmatpush1.msra.mxu0 0.0
    %2329 = vmatprep.subr.mxu0 0.0
    %2330 = vmatpush1.msra.mxu0 0.0
    %2331 = vmatprep.subr.mxu0 0.0
    %2332 = vmatpush1.msra.mxu0 0.0
    %2333 = vmatprep.subr.mxu0 0.0
    %2334 = vmatpush1.msra.mxu0 0.0
    %2335 = vmatprep.mubr.f32.mxu0 0.0
    %2336 = vmatmul.mubr.f32.gmra.mrb[0].mxu0 %v2266
    %v2337 = vpop.f32.mrb[0].mxu0
    %v2338 = vadd.f32 %v1921, %v2337
    %v2339 = vpop.f32.mrb[0].mxu0
    %2340 = vmatprep.mubr.f32.mxu0 0.0
    %2341 = vmatmul.mubr.f32.gmra.mrb[0].mxu0 %v2269
    %v2342 = vpop.f32.mrb[0].mxu0
    %v2343 = vadd.f32 %v1921, %v2342
    %v2344 = vpop.f32.mrb[0].mxu0
    %2345 = vdwg.mxu0
    %v2346 = vmax.f32 %v2245, %v2250
    %v2347 = vmax.f32 %v2255, %v2260
    %v2348 = vmax.f32 %v2346, %v2347
    %v2349 = vrot.slane %v2348, 4
    %v2350 = vmax.f32 %v2348, %v2349
    %v2351 = vrot.slane %v2350, 2
    %v2352 = vmax.f32 %v2350, %v2351
    %v2353 = vrot.slane %v2352, 1
    %v2354 = vmax.f32 %v2352, %v2353
    %v2355 = vsel %vm2111, %v2343, -inf
    %v2356 = vmax.f32 %v2338, %v2355
    %v2357 = vrot.slane %v2356, 4
    %v2358 = vmax.f32 %v2356, %v2357
    %v2359 = vrot.slane %v2358, 2
    %v2360 = vmax.f32 %v2358, %v2359
    %v2361 = vrot.slane %v2360, 1
    %v2362 = vmax.f32 %v2360, %v2361
    %v2363 = vmax.f32 %v2354, %v2362
    %v2364 = vsub.f32 %v2245, %v2363
    %v2365 = vsub.f32 %v2250, %v2363
    %v2366 = vsub.f32 %v2255, %v2363
    %v2367 = vsub.f32 %v2260, %v2363
    %v2368 = vmul.f32 %v2364, 1.442695
    %v2369 = vpow.pop %v2368
    %v2370 = vmul.f32 %v2365, 1.442695
    %v2371 = vpow.pop %v2370
    %v2372 = vmul.f32 %v2366, 1.442695
    %v2373 = vpow.pop %v2372
    %v2374 = vmul.f32 %v2367, 1.442695
    %v2375 = vpow.pop %v2374
    %v2376 = vadd.f32 %v2369, %v2371
    %v2377 = vadd.f32 %v2376, %v2373
    %v2378 = vadd.f32 %v2377, %v2375
    %v2379 = vrot.slane %v2378, 4
    %v2380 = vadd.f32 %v2378, %v2379
    %v2381 = vrot.slane %v2380, 2
    %v2382 = vadd.f32 %v2380, %v2381
    %v2383 = vrot.slane %v2382, 1
    %v2384 = vadd.f32 %v2382, %v2383
    %v2385 = vsub.f32 %v2338, %v2363
    %v2386 = vsub.f32 %v2343, %v2363
    %v2387 = vmul.f32 %v2385, 1.442695
    %v2388 = vpow.pop %v2387
    %v2389 = vmul.f32 %v2386, 1.442695
    %v2390 = vpow.pop %v2389
    %v2391 = vsel %vm2111, %v2390, 0.0
    %v2392 = vadd.f32 %v2388, %v2391
    %v2393 = vrot.slane %v2392, 4
    %v2394 = vadd.f32 %v2392, %v2393
    %v2395 = vrot.slane %v2394, 2
    %v2396 = vadd.f32 %v2394, %v2395
    %v2397 = vrot.slane %v2396, 1
    %v2398 = vadd.f32 %v2396, %v2397
    %v2399 = vadd.f32 %v2384, %v2398
    %2400 = vmin.xlane.f32.xlu0 %v2399
    %v2401 = vpop.xlane.xlu0 %2400
    %v2402 = vrcp.pop %v2401
    %2403 = vst.msk [vmem:[%s2 + $0x1] sm:$0x1] %vm2160, %v2402
    // Predicated region
    $region14: #{tpu_custom_call.1} parent=1 // pred_check
      _
    $region15: #{tpu_custom_call.1} parent=1 // pred_check_branch
      %2405 = sbr.rel (0) target = $region17
    $region16: #{tpu_custom_call.1} parent=1 // pred_region
      _
    $region17: #{tpu_custom_call.1} parent=1 // pred_fallthru
      _
    // Predicated region
    $region18: #{tpu_custom_call.1} parent=1 // pred_check
      _
    $region19: #{tpu_custom_call.1} parent=1 // pred_check_branch
      %2407 = sbr.rel (0) target = $region21
    $region20: #{tpu_custom_call.1} parent=1 // pred_region
      _
    $region21: #{tpu_custom_call.1} parent=1 // pred_fallthru
      _
    %2408 = vsyncpa [#allocation4], 1

</llo_original>
